<compile_context>
chip_gen: v7x
topology: tpu7x:2x2x1
jax: 0.10.0
libtpu: 0.0.40
codegen_flags: <defaults>
</compile_context>

<pallas_src>
import jax
import jax.numpy as jnp
import numpy as np
from jax.experimental import pallas as pl
from jax.experimental.pallas import tpu as pltpu

BN_EPS = 1e-5


# --------------------------------------------------------------------------
# helpers
# --------------------------------------------------------------------------
def _padded_tile_bytes(rows, cols, dtype_bytes=4):
    r = max(-(-rows // 8) * 8, 8)
    c = max(-(-cols // 128) * 128, 128)
    return r * c * dtype_bytes


def _vmem_budget_bytes():
    """Generation-aware VMEM budget (bytes) for this kernel."""
    cap = 64 << 20  # conservative fallback if the hardware query fails
    try:
        info = pltpu.get_tpu_info()
        cap = int(getattr(info, "vmem_capacity_bytes", cap))
    except Exception:
        pass
    if cap <= (64 << 20):
        # v7x-class (64 MiB / TensorCore): leave >=12 MiB headroom for
        # double-buffered tiles + compiler internal scratch.
        return max(32 << 20, min(52 << 20, cap - (8 << 20)))
    # v5e / v6e (128 MiB physical): allow ~100 MiB, keep headroom.
    return min(100 << 20, cap - (24 << 20))


def _pick_batch_tile(batch):
    """Largest batch tile (multiple of 8, <=2048) dividing the batch."""
    for cand in (2048, 1024, 512, 256, 128, 64, 32, 16, 8):
        if batch % cand == 0:
            return cand
    return None


def _pack_params(b0, g0, be0, b1, g1, be1, b2, pmax):
    """Pack all 1-row params into a single [8, pmax] f32 buffer (one DMA)."""
    def row(v):
        v = jnp.asarray(v, jnp.float32).reshape(1, -1)
        return jnp.pad(v, ((0, 0), (0, pmax - v.shape[1])))

    rows = [row(b0), row(g0), row(be0), row(b1), row(g1), row(be1), row(b2),
            jnp.zeros((1, pmax), jnp.float32)]
    return jnp.concatenate(rows, axis=0)


# --------------------------------------------------------------------------
# fused single-step kernel (batch fits in one tile; grid = (1,))
# --------------------------------------------------------------------------
def _make_fused_kernel(batch, h0_size, h1_size, out_size):
    inv_b = 1.0 / float(batch)

    def bn_relu(h, gamma, beta):
        # Two-pass (centered) variance: cheap here and more stable than
        # E[h^2]-mean^2 when everything is already in vregs.
        mean = jnp.sum(h, axis=0, keepdims=True) * inv_b
        d = h - mean
        var = jnp.sum(d * d, axis=0, keepdims=True) * inv_b
        scale = gamma * jax.lax.rsqrt(var + BN_EPS)
        return jnp.maximum(d * scale + beta, 0.0)

    def kernel(noise_ref, w0_ref, w1_ref, w2_ref, pp_ref, out_ref):
        b0 = pp_ref[0:1, :h0_size]
        g0 = pp_ref[1:2, :h0_size]
        be0 = pp_ref[2:3, :h0_size]
        b1 = pp_ref[3:4, :h1_size]
        g1 = pp_ref[4:5, :h1_size]
        be1 = pp_ref[5:6, :h1_size]
        b2 = pp_ref[6:7, :out_size]

        x = noise_ref[...].astype(jnp.float32)
        h = jnp.dot(x, w0_ref[...], preferred_element_type=jnp.float32) + b0
        h = bn_relu(h, g0, be0)
        h = jnp.dot(h, w1_ref[...], preferred_element_type=jnp.float32) + b1
        h = bn_relu(h, g1, be1)
        y = jnp.dot(h, w2_ref[...], preferred_element_type=jnp.float32) + b2
        # TODO(synk): if profiling shows the narrow (out_size<128) store
        # exposed, emit a lane-dense (batch,128) output and slice caller-side.
        out_ref[...] = jax.nn.sigmoid(y)

    return kernel


# --------------------------------------------------------------------------
# 3-phase batch-tiled kernel (exact full-batch BN stats for large batches)
# --------------------------------------------------------------------------
def _make_phased_kernel(tm, batch, h0_size, h1_size, out_size):
    inv_b = 1.0 / float(batch)

    def kernel(noise_ref, w0_ref, w1_ref, w2_ref, pp_ref, out_ref,
               h_ref, s0sum_ref, s0sq_ref, s1sum_ref, s1sq_ref):
        phase = pl.program_id(0)
        i = pl.program_id(1)
        start = pl.multiple_of(i * tm, tm)
        rows = pl.ds(start, tm)

        # ---- phase 0: Linear0 on this tile + accumulate BN0 stats ---------
        @pl.when(phase == 0)
        def _():
            @pl.when(i == 0)
            def _():
                s0sum_ref[...] = jnp.zeros_like(s0sum_ref)
                s0sq_ref[...] = jnp.zeros_like(s0sq_ref)

            b0 = pp_ref[0:1, :h0_size]
            x = noise_ref[...].astype(jnp.float32)
            h = jnp.dot(x, w0_ref[...], preferred_element_type=jnp.float32) + b0
            h_ref[rows, :h0_size] = h
            s0sum_ref[...] += jnp.sum(h, axis=0, keepdims=True)
            s0sq_ref[...] += jnp.sum(h * h, axis=0, keepdims=True)

        # ---- phase 1: BN0 + ReLU + Linear1 + accumulate BN1 stats ----------
        @pl.when(phase == 1)
        def _():
            @pl.when(i == 0)
            def _():
                s1sum_ref[...] = jnp.zeros_like(s1sum_ref)
                s1sq_ref[...] = jnp.zeros_like(s1sq_ref)

            g0 = pp_ref[1:2, :h0_size]
            be0 = pp_ref[2:3, :h0_size]
            b1 = pp_ref[3:4, :h1_size]
            mean = s0sum_ref[...] * inv_b
            var = jnp.maximum(s0sq_ref[...] * inv_b - mean * mean, 0.0)
            scale = g0 * jax.lax.rsqrt(var + BN_EPS)   # folded gamma*rsqrt
            shift = be0 - mean * scale

            h = h_ref[rows, :h0_size]
            h = jnp.maximum(h * scale + shift, 0.0)
            h1 = jnp.dot(h, w1_ref[...], preferred_element_type=jnp.float32) + b1
            # h0 for this tile is dead after the read above: reuse the SAME
            # scratch rows for h1 (single (batch, max(h0,h1)) buffer).
            h_ref[rows, :h1_size] = h1
            s1sum_ref[...] += jnp.sum(h1, axis=0, keepdims=True)
            s1sq_ref[...] += jnp.sum(h1 * h1, axis=0, keepdims=True)

        # ---- phase 2: BN1 + ReLU + head Linear + Sigmoid --------------------
        @pl.when(phase == 2)
        def _():
            g1 = pp_ref[4:5, :h1_size]
            be1 = pp_ref[5:6, :h1_size]
            b2 = pp_ref[6:7, :out_size]
            mean = s1sum_ref[...] * inv_b
            var = jnp.maximum(s1sq_ref[...] * inv_b - mean * mean, 0.0)
            scale = g1 * jax.lax.rsqrt(var + BN_EPS)
            shift = be1 - mean * scale

            h = h_ref[rows, :h1_size]
            h = jnp.maximum(h * scale + shift, 0.0)
            y = jnp.dot(h, w2_ref[...], preferred_element_type=jnp.float32) + b2
            out_ref[...] = jax.nn.sigmoid(y)

    return kernel


# --------------------------------------------------------------------------
# wrapper
# --------------------------------------------------------------------------
def gan_generator_forward(noise, params, *, tm=None):
    """Whole generator forward in one Pallas kernel call."""
    (w0, b0, g0, be0, w1, b1, g1, be1, w2, b2) = params
    batch, noise_size = noise.shape
    h0_size, h1_size, out_size = w0.shape[1], w1.shape[1], w2.shape[1]
    hmax = max(h0_size, h1_size)
    pmax = max(128, h0_size, h1_size, out_size)   # lane-dense packed params

    packed = _pack_params(b0, g0, be0, b1, g1, be1, b2, pmax)
    budget = _vmem_budget_bytes()

    weight_bytes = (_padded_tile_bytes(noise_size, h0_size)
                    + _padded_tile_bytes(h0_size, h1_size)
                    + _padded_tile_bytes(h1_size, out_size)
                    + _padded_tile_bytes(8, pmax))

    # Conservative estimate of the fused path's VMEM footprint (input, output,
    # both intermediates plus one temp copy, weights, fixed overhead).
    fused_bytes = (_padded_tile_bytes(batch, noise_size)
                   + _padded_tile_bytes(batch, out_size)
                   + 3 * _padded_tile_bytes(batch, hmax)
                   + weight_bytes + (2 << 20))

    use_fused = fused_bytes <= budget if (tm is None or tm >= batch) else False

    if use_fused:
        # ---------------- fused single-step path (grid = (1,)) -------------
        kernel = _make_fused_kernel(batch, h0_size, h1_size, out_size)
        grid_spec = pltpu.PrefetchScalarGridSpec(
            num_scalar_prefetch=0,
            grid=(1,),
            in_specs=[
                pl.BlockSpec((batch, noise_size), lambda i: (0, 0)),
                pl.BlockSpec((noise_size, h0_size), lambda i: (0, 0)),
                pl.BlockSpec((h0_size, h1_size), lambda i: (0, 0)),
                pl.BlockSpec((h1_size, out_size), lambda i: (0, 0)),
                pl.BlockSpec((8, pmax), lambda i: (0, 0)),
            ],
            out_specs=pl.BlockSpec((batch, out_size), lambda i: (0, 0)),
        )
        vmem_limit = int(min(fused_bytes + (8 << 20), budget))
        return pl.pallas_call(
            kernel,
            out_shape=jax.ShapeDtypeStruct((batch, out_size), jnp.float32),
            grid_spec=grid_spec,
            compiler_params=pltpu.CompilerParams(
                dimension_semantics=("arbitrary",),
                vmem_limit_bytes=vmem_limit,
            ),
        )(noise, w0, w1, w2, packed)

    # -------------------- 3-phase batch-tiled path --------------------------
    if tm is None:
        tm = _pick_batch_tile(batch)
    if tm is None or batch % tm != 0 or tm % 8 != 0:
        raise ValueError(
            "phased path needs a batch tile that is a multiple of 8 and "
            "divides the batch (got batch=%d, tm=%s)" % (batch, tm))
    nb = batch // tm

    scratch_bytes = (_padded_tile_bytes(batch, hmax)          # shared h0/h1
                     + 4 * _padded_tile_bytes(1, hmax))       # BN stat vectors
    block_bytes = 2 * (_padded_tile_bytes(tm, noise_size)
                       + weight_bytes
                       + _padded_tile_bytes(tm, out_size))
    need = scratch_bytes + block_bytes
    if need > budget:
        # TODO(synk): for batches whose pre-BN activations exceed VMEM, spill
        # them to HBM (extra output + input_output_aliases) instead of erroring.
        raise ValueError("batch too large to keep pre-BN activations in VMEM")
    vmem_limit = int(min(need + (8 << 20), budget))

    kernel = _make_phased_kernel(tm, batch, h0_size, h1_size, out_size)

    grid_spec = pltpu.PrefetchScalarGridSpec(
        num_scalar_prefetch=0,
        grid=(3, nb),
        in_specs=[
            # noise only needed in phase 0; park at the LAST phase-0 block so
            # the phase transition does not trigger a redundant re-DMA.
            pl.BlockSpec((tm, noise_size),
                         lambda p, i: (jnp.where(p == 0, i, nb - 1), 0)),
            pl.BlockSpec((noise_size, h0_size), lambda p, i: (0, 0)),
            pl.BlockSpec((h0_size, h1_size), lambda p, i: (0, 0)),
            pl.BlockSpec((h1_size, out_size), lambda p, i: (0, 0)),
            pl.BlockSpec((8, pmax), lambda p, i: (0, 0)),
            # TODO(synk): pipeline_mode=pl.Buffered(1) on the constant-index
            # inputs would shave ~60 KiB of double-buffer VMEM.
        ],
        # output produced only in phase 2; index parked at 0 before that so the
        # pipeline never flushes an uninitialized block (index never changes
        # until phase-2 block 0 has been written).
        out_specs=pl.BlockSpec((tm, out_size),
                               lambda p, i: (jnp.where(p == 2, i, 0), 0)),
        scratch_shapes=[
            pltpu.VMEM((batch, hmax), jnp.float32),   # shared pre-BN h0 / h1
            pltpu.VMEM((1, h0_size), jnp.float32),    # sum(h0)
            pltpu.VMEM((1, h0_size), jnp.float32),    # sum(h0^2)
            pltpu.VMEM((1, h1_size), jnp.float32),    # sum(h1)
            pltpu.VMEM((1, h1_size), jnp.float32),    # sum(h1^2)
        ],
    )

    return pl.pallas_call(
        kernel,
        out_shape=jax.ShapeDtypeStruct((batch, out_size), jnp.float32),
        grid_spec=grid_spec,
        compiler_params=pltpu.CompilerParams(
            # Batch axis stays "arbitrary": BN statistics accumulate in shared
            # VMEM scratch.
            # TODO(synk): on v7x, per-core partial stats + a phase-boundary
            # combine (VMEM_SHARED + core_barrier) would allow CORE_PARALLEL
            # on the batch axis and use both TensorCores.
            dimension_semantics=("arbitrary", "arbitrary"),
            vmem_limit_bytes=vmem_limit,
        ),
    )(noise, w0, w1, w2, packed)


# --------------------------------------------------------------------------
# parameters + pure-JAX reference
# --------------------------------------------------------------------------
def init_params(key, noise_size, out_size, hidden_size):
    """Deterministic synthetic parameters (shapes match the PyTorch module)."""
    ks = jax.random.split(key, 6)

    def linear(kw, kb, fan_in, fan_out):
        # PyTorch Linear stores weight as [out, in]; we use [in, out].
        bound = 1.0 / np.sqrt(fan_in)
        w = jax.random.uniform(kw, (fan_in, fan_out), jnp.float32, -bound, bound)
        b = jax.random.uniform(kb, (1, fan_out), jnp.float32, -bound, bound)
        return w, b

    w0, b0 = linear(ks[0], ks[1], noise_size, hidden_size)
    w1, b1 = linear(ks[2], ks[3], hidden_size, 2 * hidden_size)
    w2, b2 = linear(ks[4], ks[5], 2 * hidden_size, out_size)

    # BatchNorm1d default init: gamma = 1, beta = 0.
    g0 = jnp.ones((1, hidden_size), jnp.float32)
    be0 = jnp.zeros((1, hidden_size), jnp.float32)
    g1 = jnp.ones((1, 2 * hidden_size), jnp.float32)
    be1 = jnp.zeros((1, 2 * hidden_size), jnp.float32)

    return (w0, b0, g0, be0, w1, b1, g1, be1, w2, b2)


def reference_forward(noise, params):
    """Pure-JAX reference mirroring the PyTorch forward (training-mode BN)."""
    (w0, b0, g0, be0, w1, b1, g1, be1, w2, b2) = params

    def blk(x, w, b, g, be):
        h = x @ w + b
        m = jnp.mean(h, axis=0, keepdims=True)
        v = jnp.mean((h - m) ** 2, axis=0, keepdims=True)
        h = (h - m) / jnp.sqrt(v + BN_EPS) * g + be
        return jnp.maximum(h, 0.0)

    h = blk(noise, w0, b0, g0, be0)
    h = blk(h, w1, b1, g1, be1)
    return jax.nn.sigmoid(h @ w2 + b2)


if __name__ == "__main__":
    noise_size, out_size, hidden_size = 16, 16, 32

    key = jax.random.PRNGKey(0)
    k_noise, k_params = jax.random.split(key)
    params = init_params(k_params, noise_size, out_size, hidden_size)

    # 1) Default path: fused single-step kernel (batch fits one tile).
    batch = 256
    noise = jax.random.normal(k_noise, (batch, noise_size), jnp.float32)
    out = jax.block_until_ready(gan_generator_forward(noise, params))
    ref = reference_forward(noise, params)
    np.testing.assert_allclose(np.asarray(out), np.asarray(ref),
                               rtol=1e-4, atol=1e-4)
    assert out.shape == (batch, out_size)

    # 2) Force the 3-phase batch-tiled path (tm=64 -> grid (3, 4)) to exercise
    #    the streaming BN-stat accumulation and scratch reuse.
    out_p = jax.block_until_ready(gan_generator_forward(noise, params, tm=64))
    np.testing.assert_allclose(np.asarray(out_p), np.asarray(ref),
                               rtol=1e-4, atol=1e-4)

    # 3) Tiny batch (fused path, full-extent blocks).
    small = jax.random.normal(jax.random.PRNGKey(1), (8, noise_size), jnp.float32)
    out_s = jax.block_until_ready(gan_generator_forward(small, params))
    ref_s = reference_forward(small, params)
    np.testing.assert_allclose(np.asarray(out_s), np.asarray(ref_s),
                               rtol=1e-4, atol=1e-4)

    print("KERNEL_OK")
</pallas_src>

<mosaic_0001>
module attributes {stable_mosaic.version = 11 : i64} {
  func.func @kernel(%arg0: i32, %arg1: memref<256x16xf32, #tpu.memory_space<vmem>>, %arg2: memref<16x32xf32, #tpu.memory_space<vmem>>, %arg3: memref<32x64xf32, #tpu.memory_space<vmem>>, %arg4: memref<64x16xf32, #tpu.memory_space<vmem>>, %arg5: memref<8x128xf32, #tpu.memory_space<vmem>>, %arg6: memref<256x16xf32, #tpu.memory_space<vmem>>) attributes {dimension_semantics = [#tpu.dimension_semantics<arbitrary>], iteration_bounds = array<i64: 1>, scalar_prefetch = 0 : i64, scratch_operands = 0 : i64, tpu.core_type = #tpu.core_type<tc>, window_params = [{pipeline_mode = #tpu.pipeline_mode<synchronous>, transform_indices = @transform_0, window_bounds = array<i64: 256, 16>}, {pipeline_mode = #tpu.pipeline_mode<synchronous>, transform_indices = @transform_1, window_bounds = array<i64: 16, 32>}, {pipeline_mode = #tpu.pipeline_mode<synchronous>, transform_indices = @transform_2, window_bounds = array<i64: 32, 64>}, {pipeline_mode = #tpu.pipeline_mode<synchronous>, transform_indices = @transform_3, window_bounds = array<i64: 64, 16>}, {pipeline_mode = #tpu.pipeline_mode<synchronous>, transform_indices = @transform_4, window_bounds = array<i64: 8, 128>}, {pipeline_mode = #tpu.pipeline_mode<synchronous>, transform_indices = @transform_5, window_bounds = array<i64: 256, 16>}]} {
    %c0 = arith.constant 0 : index
    %c0_0 = arith.constant 0 : index
    %0 = vector.load %arg5[%c0, %c0_0] : memref<8x128xf32, #tpu.memory_space<vmem>>, vector<1x32xf32>
    %c1 = arith.constant 1 : index
    %c0_1 = arith.constant 0 : index
    %1 = vector.load %arg5[%c1, %c0_1] : memref<8x128xf32, #tpu.memory_space<vmem>>, vector<1x32xf32>
    %c2 = arith.constant 2 : index
    %c0_2 = arith.constant 0 : index
    %2 = vector.load %arg5[%c2, %c0_2] : memref<8x128xf32, #tpu.memory_space<vmem>>, vector<1x32xf32>
    %c3 = arith.constant 3 : index
    %c0_3 = arith.constant 0 : index
    %3 = vector.load %arg5[%c3, %c0_3] : memref<8x128xf32, #tpu.memory_space<vmem>>, vector<1x64xf32>
    %c4 = arith.constant 4 : index
    %c0_4 = arith.constant 0 : index
    %4 = vector.load %arg5[%c4, %c0_4] : memref<8x128xf32, #tpu.memory_space<vmem>>, vector<1x64xf32>
    %c5 = arith.constant 5 : index
    %c0_5 = arith.constant 0 : index
    %5 = vector.load %arg5[%c5, %c0_5] : memref<8x128xf32, #tpu.memory_space<vmem>>, vector<1x64xf32>
    %c6 = arith.constant 6 : index
    %c0_6 = arith.constant 0 : index
    %6 = vector.load %arg5[%c6, %c0_6] : memref<8x128xf32, #tpu.memory_space<vmem>>, vector<1x16xf32>
    %c0_7 = arith.constant 0 : index
    %c0_8 = arith.constant 0 : index
    %7 = vector.load %arg1[%c0_7, %c0_8] : memref<256x16xf32, #tpu.memory_space<vmem>>, vector<256x16xf32>
    %c0_9 = arith.constant 0 : index
    %c0_10 = arith.constant 0 : index
    %8 = vector.load %arg2[%c0_9, %c0_10] : memref<16x32xf32, #tpu.memory_space<vmem>>, vector<16x32xf32>
    %cst = arith.constant dense<0.000000e+00> : vector<256x32xf32>
    %9 = tpu.matmul %7, %8, %cst {dimension_numbers = #tpu.dot_dimension_numbers<[1], [0], [0], [1], [0, 0, 1, 1], [], []>} : vector<256x16xf32>, vector<16x32xf32>, vector<256x32xf32> -> vector<256x32xf32>
    %10 = vector.broadcast %0 : vector<1x32xf32> to vector<256x32xf32>
    %11 = arith.addf %9, %10 : vector<256x32xf32>
    %cst_11 = arith.constant dense<0.000000e+00> : vector<32xf32>
    %12 = vector.multi_reduction <add>, %11, %cst_11 [0] : vector<256x32xf32> to vector<32xf32>
    %13 = vector.shape_cast %12 : vector<32xf32> to vector<1x32xf32>
    %cst_12 = arith.constant 3.906250e-03 : f32
    %14 = vector.broadcast %cst_12 : f32 to vector<1x32xf32>
    %15 = arith.mulf %13, %14 : vector<1x32xf32>
    %16 = vector.broadcast %15 : vector<1x32xf32> to vector<256x32xf32>
    %17 = arith.subf %11, %16 : vector<256x32xf32>
    %18 = arith.mulf %17, %17 : vector<256x32xf32>
    %cst_13 = arith.constant dense<0.000000e+00> : vector<32xf32>
    %19 = vector.multi_reduction <add>, %18, %cst_13 [0] : vector<256x32xf32> to vector<32xf32>
    %20 = vector.shape_cast %19 : vector<32xf32> to vector<1x32xf32>
    %cst_14 = arith.constant 3.906250e-03 : f32
    %21 = vector.broadcast %cst_14 : f32 to vector<1x32xf32>
    %22 = arith.mulf %20, %21 : vector<1x32xf32>
    %cst_15 = arith.constant 9.99999974E-6 : f32
    %23 = vector.broadcast %cst_15 : f32 to vector<1x32xf32>
    %24 = arith.addf %22, %23 : vector<1x32xf32>
    %25 = math.rsqrt %24 : vector<1x32xf32>
    %26 = arith.mulf %1, %25 : vector<1x32xf32>
    %27 = vector.broadcast %26 : vector<1x32xf32> to vector<256x32xf32>
    %28 = arith.mulf %17, %27 : vector<256x32xf32>
    %29 = vector.broadcast %2 : vector<1x32xf32> to vector<256x32xf32>
    %30 = arith.addf %28, %29 : vector<256x32xf32>
    %cst_16 = arith.constant 0.000000e+00 : f32
    %31 = vector.broadcast %cst_16 : f32 to vector<256x32xf32>
    %32 = arith.maximumf %30, %31 : vector<256x32xf32>
    %c0_17 = arith.constant 0 : index
    %c0_18 = arith.constant 0 : index
    %33 = vector.load %arg3[%c0_17, %c0_18] : memref<32x64xf32, #tpu.memory_space<vmem>>, vector<32x64xf32>
    %cst_19 = arith.constant dense<0.000000e+00> : vector<256x64xf32>
    %34 = tpu.matmul %32, %33, %cst_19 {dimension_numbers = #tpu.dot_dimension_numbers<[1], [0], [0], [1], [0, 0, 1, 1], [], []>} : vector<256x32xf32>, vector<32x64xf32>, vector<256x64xf32> -> vector<256x64xf32>
    %35 = vector.broadcast %3 : vector<1x64xf32> to vector<256x64xf32>
    %36 = arith.addf %34, %35 : vector<256x64xf32>
    %cst_20 = arith.constant dense<0.000000e+00> : vector<64xf32>
    %37 = vector.multi_reduction <add>, %36, %cst_20 [0] : vector<256x64xf32> to vector<64xf32>
    %38 = vector.shape_cast %37 : vector<64xf32> to vector<1x64xf32>
    %cst_21 = arith.constant 3.906250e-03 : f32
    %39 = vector.broadcast %cst_21 : f32 to vector<1x64xf32>
    %40 = arith.mulf %38, %39 : vector<1x64xf32>
    %41 = vector.broadcast %40 : vector<1x64xf32> to vector<256x64xf32>
    %42 = arith.subf %36, %41 : vector<256x64xf32>
    %43 = arith.mulf %42, %42 : vector<256x64xf32>
    %cst_22 = arith.constant dense<0.000000e+00> : vector<64xf32>
    %44 = vector.multi_reduction <add>, %43, %cst_22 [0] : vector<256x64xf32> to vector<64xf32>
    %45 = vector.shape_cast %44 : vector<64xf32> to vector<1x64xf32>
    %cst_23 = arith.constant 3.906250e-03 : f32
    %46 = vector.broadcast %cst_23 : f32 to vector<1x64xf32>
    %47 = arith.mulf %45, %46 : vector<1x64xf32>
    %cst_24 = arith.constant 9.99999974E-6 : f32
    %48 = vector.broadcast %cst_24 : f32 to vector<1x64xf32>
    %49 = arith.addf %47, %48 : vector<1x64xf32>
    %50 = math.rsqrt %49 : vector<1x64xf32>
    %51 = arith.mulf %4, %50 : vector<1x64xf32>
    %52 = vector.broadcast %51 : vector<1x64xf32> to vector<256x64xf32>
    %53 = arith.mulf %42, %52 : vector<256x64xf32>
    %54 = vector.broadcast %5 : vector<1x64xf32> to vector<256x64xf32>
    %55 = arith.addf %53, %54 : vector<256x64xf32>
    %cst_25 = arith.constant 0.000000e+00 : f32
    %56 = vector.broadcast %cst_25 : f32 to vector<256x64xf32>
    %57 = arith.maximumf %55, %56 : vector<256x64xf32>
    %c0_26 = arith.constant 0 : index
    %c0_27 = arith.constant 0 : index
    %58 = vector.load %arg4[%c0_26, %c0_27] : memref<64x16xf32, #tpu.memory_space<vmem>>, vector<64x16xf32>
    %cst_28 = arith.constant dense<0.000000e+00> : vector<256x16xf32>
    %59 = tpu.matmul %57, %58, %cst_28 {dimension_numbers = #tpu.dot_dimension_numbers<[1], [0], [0], [1], [0, 0, 1, 1], [], []>} : vector<256x64xf32>, vector<64x16xf32>, vector<256x16xf32> -> vector<256x16xf32>
    %60 = vector.broadcast %6 : vector<1x16xf32> to vector<256x16xf32>
    %61 = arith.addf %59, %60 : vector<256x16xf32>
    %62 = arith.negf %61 : vector<256x16xf32>
    %63 = math.exp %62 : vector<256x16xf32>
    %cst_29 = arith.constant 1.000000e+00 : f32
    %64 = vector.broadcast %cst_29 : f32 to vector<256x16xf32>
    %65 = arith.addf %64, %63 : vector<256x16xf32>
    %66 = arith.divf %64, %65 : vector<256x16xf32>
    %c0_30 = arith.constant 0 : index
    %c0_31 = arith.constant 0 : index
    %67 = vector.load %arg6[%c0_30, %c0_31] : memref<256x16xf32, #tpu.memory_space<vmem>>, vector<256x16xf32>
    tpu.vector_store %arg6[%c0_30, %c0_31], %66 {strides = array<i32>} : memref<256x16xf32, #tpu.memory_space<vmem>>, vector<256x16xf32>,
    return
  }
  func.func @transform_0(%arg0: i32) -> (i32, i32) {
    %c0_i32 = arith.constant 0 : i32
    %c0_i32_0 = arith.constant 0 : i32
    %c0_i32_1 = arith.constant 0 : i32
    return %c0_i32, %c0_i32_0 : i32, i32
  }
  func.func @transform_1(%arg0: i32) -> (i32, i32) {
    %c0_i32 = arith.constant 0 : i32
    %c0_i32_0 = arith.constant 0 : i32
    %c0_i32_1 = arith.constant 0 : i32
    return %c0_i32, %c0_i32_0 : i32, i32
  }
  func.func @transform_2(%arg0: i32) -> (i32, i32) {
    %c0_i32 = arith.constant 0 : i32
    %c0_i32_0 = arith.constant 0 : i32
    %c0_i32_1 = arith.constant 0 : i32
    return %c0_i32, %c0_i32_0 : i32, i32
  }
  func.func @transform_3(%arg0: i32) -> (i32, i32) {
    %c0_i32 = arith.constant 0 : i32
    %c0_i32_0 = arith.constant 0 : i32
    %c0_i32_1 = arith.constant 0 : i32
    return %c0_i32, %c0_i32_0 : i32, i32
  }
  func.func @transform_4(%arg0: i32) -> (i32, i32) {
    %c0_i32 = arith.constant 0 : i32
    %c0_i32_0 = arith.constant 0 : i32
    %c0_i32_1 = arith.constant 0 : i32
    return %c0_i32, %c0_i32_0 : i32, i32
  }
  func.func @transform_5(%arg0: i32) -> (i32, i32) {
    %c0_i32 = arith.constant 0 : i32
    %c0_i32_0 = arith.constant 0 : i32
    %c0_i32_1 = arith.constant 0 : i32
    return %c0_i32, %c0_i32_0 : i32, i32
  }
}

</mosaic_0001>

<llo_original>
// kernel: tpu_custom_call.1
$region0: #{tpu_custom_call.1}
  #allocation0 [shape = 'u32[]', space=smem, size = 0x4, offset = 0x4, fixed_abs, tag = 'smem constant byte address 0x4 - core index']
  #allocation1 [shape = 'u32[144,128]{1,0:T(1,128)}', space=vmem, size = 0x12000, scoped, tag = 'internal scratch']
  %s0 = inlined_call_operand.vmem [shape: f32[256,16], index: 0, kind: input, shape index: {}]
  %s1 = inlined_call_operand.vmem [shape: f32[16,32], index: 1, kind: input, shape index: {}]
  %s2 = inlined_call_operand.vmem [shape: f32[32,64], index: 2, kind: input, shape index: {}]
  %s3 = inlined_call_operand.vmem [shape: f32[64,16], index: 3, kind: input, shape index: {}]
  %s4 = inlined_call_operand.vmem [shape: f32[8,128], index: 4, kind: input, shape index: {}]
  %s5 = inlined_call_operand.vmem [shape: f32[256,16], index: 5, kind: output, shape index: {}]
  %s6 = sld [smem:[#allocation0]]
  $region30: #{tpu_custom_call.1} parent=0
    _
  %s8 = ssub.s32 1, %s6
  %s9 = scalar_select 0, %s8, %s6
  // Predicated region
  $region2: #{tpu_custom_call.1} parent=0 // pred_check
    _
  $region3: #{tpu_custom_call.1} parent=0 // pred_check_branch
    %11 = sbr.rel (0) target = $region5
  $region4: #{tpu_custom_call.1} parent=0 // pred_region
    _
  $region5: #{tpu_custom_call.1} parent=0 // pred_fallthru
    _
  // Predicated region
  $region6: #{tpu_custom_call.1} parent=0 // pred_check
    _
  $region7: #{tpu_custom_call.1} parent=0 // pred_check_branch
    %13 = sbr.rel (0) target = $region9
  $region8: #{tpu_custom_call.1} parent=0 // pred_region
    _
  $region9: #{tpu_custom_call.1} parent=0 // pred_fallthru
    _
  // Predicated region
  $region10: #{tpu_custom_call.1} parent=0 // pred_check
    _
  $region11: #{tpu_custom_call.1} parent=0 // pred_check_branch
    %15 = sbr.rel (0) target = $region13
  $region12: #{tpu_custom_call.1} parent=0 // pred_region
    _
  $region13: #{tpu_custom_call.1} parent=0 // pred_fallthru
    _
  // Predicated region
  $region14: #{tpu_custom_call.1} parent=0 // pred_check
    _
  $region15: #{tpu_custom_call.1} parent=0 // pred_check_branch
    %17 = sbr.rel (0) target = $region17
  $region16: #{tpu_custom_call.1} parent=0 // pred_region
    _
  $region17: #{tpu_custom_call.1} parent=0 // pred_fallthru
    _
  // Predicated region
  $region18: #{tpu_custom_call.1} parent=0 // pred_check
    _
  $region19: #{tpu_custom_call.1} parent=0 // pred_check_branch
    %19 = sbr.rel (0) target = $region21
  $region20: #{tpu_custom_call.1} parent=0 // pred_region
    _
  $region21: #{tpu_custom_call.1} parent=0 // pred_fallthru
    _
  %v20 = vld [vmem:[%s4] sm:$0x1]
  %v21 = vld [vmem:[%s4 + $0x1] sm:$0x1]
  %v22 = vld [vmem:[%s4 + $0x2] sm:$0x1]
  %v23 = vld [vmem:[%s4 + $0x3] sm:$0x1]
  %v24 = vld [vmem:[%s4 + $0x4] sm:$0x1]
  %v25 = vld [vmem:[%s4 + $0x5] sm:$0x1]
  %v26 = vld [vmem:[%s4 + $0x6] sm:$0x1]
  %v27 = vld [vmem:[%s0] sm:$0xff]
  %v28 = vld [vmem:[%s0 + $0x8] sm:$0xff]
  %v29 = vld [vmem:[%s0 + $0x10] sm:$0xff]
  %v30 = vld [vmem:[%s0 + $0x18] sm:$0xff]
  %v31 = vld [vmem:[%s0 + $0x20] sm:$0xff]
  %v32 = vld [vmem:[%s0 + $0x28] sm:$0xff]
  %v33 = vld [vmem:[%s0 + $0x30] sm:$0xff]
  %v34 = vld [vmem:[%s0 + $0x38] sm:$0xff]
  %v35 = vld [vmem:[%s0 + $0x40] sm:$0xff]
  %v36 = vld [vmem:[%s0 + $0x48] sm:$0xff]
  %v37 = vld [vmem:[%s0 + $0x50] sm:$0xff]
  %v38 = vld [vmem:[%s0 + $0x58] sm:$0xff]
  %v39 = vld [vmem:[%s0 + $0x60] sm:$0xff]
  %v40 = vld [vmem:[%s0 + $0x68] sm:$0xff]
  %v41 = vld [vmem:[%s0 + $0x70] sm:$0xff]
  %v42 = vld [vmem:[%s0 + $0x78] sm:$0xff]
  %v43 = vld [vmem:[%s0 + $0x80] sm:$0xff]
  %v44 = vld [vmem:[%s0 + $0x88] sm:$0xff]
  %v45 = vld [vmem:[%s0 + $0x90] sm:$0xff]
  %v46 = vld [vmem:[%s0 + $0x98] sm:$0xff]
  %v47 = vld [vmem:[%s0 + $0xa0] sm:$0xff]
  %v48 = vld [vmem:[%s0 + $0xa8] sm:$0xff]
  %v49 = vld [vmem:[%s0 + $0xb0] sm:$0xff]
  %v50 = vld [vmem:[%s0 + $0xb8] sm:$0xff]
  %v51 = vld [vmem:[%s0 + $0xc0] sm:$0xff]
  %v52 = vld [vmem:[%s0 + $0xc8] sm:$0xff]
  %v53 = vld [vmem:[%s0 + $0xd0] sm:$0xff]
  %v54 = vld [vmem:[%s0 + $0xd8] sm:$0xff]
  %v55 = vld [vmem:[%s0 + $0xe0] sm:$0xff]
  %v56 = vld [vmem:[%s0 + $0xe8] sm:$0xff]
  %v57 = vld [vmem:[%s0 + $0xf0] sm:$0xff]
  %v58 = vld [vmem:[%s0 + $0xf8] sm:$0xff]
  %v59 = vld [vmem:[%s1] sm:$0xff]
  %v60 = vld [vmem:[%s1 + $0x8] sm:$0xff]
  %v61 = vlaneseq
  %v62 = vshrl.u32 %v61, 7
  %v63 = vsub.s32 0, %v62
  %v64 = vrot.slane %v20, %v63
  %vm65 = vcmask 130048
  %v67 = vsel %vm65, %v27, 0
  %v70 = vsel %vm65, %v28, 0
  %v73 = vsel %vm65, %v29, 0
  %v76 = vsel %vm65, %v30, 0
  %v79 = vsel %vm65, %v31, 0
  %v82 = vsel %vm65, %v32, 0
  %v85 = vsel %vm65, %v33, 0
  %v88 = vsel %vm65, %v34, 0
  %v91 = vsel %vm65, %v35, 0
  %v94 = vsel %vm65, %v36, 0
  %v97 = vsel %vm65, %v37, 0
  %v100 = vsel %vm65, %v38, 0
  %v103 = vsel %vm65, %v39, 0
  %v106 = vsel %vm65, %v40, 0
  %v109 = vsel %vm65, %v41, 0
  %v112 = vsel %vm65, %v42, 0
  %v115 = vsel %vm65, %v43, 0
  %v118 = vsel %vm65, %v44, 0
  %v121 = vsel %vm65, %v45, 0
  %v124 = vsel %vm65, %v46, 0
  %v127 = vsel %vm65, %v47, 0
  %v130 = vsel %vm65, %v48, 0
  %v133 = vsel %vm65, %v49, 0
  %v136 = vsel %vm65, %v50, 0
  %v139 = vsel %vm65, %v51, 0
  %v142 = vsel %vm65, %v52, 0
  %v145 = vsel %vm65, %v53, 0
  %v148 = vsel %vm65, %v54, 0
  %v151 = vsel %vm65, %v55, 0
  %v154 = vsel %vm65, %v56, 0
  %v157 = vsel %vm65, %v57, 0
  %v160 = vsel %vm65, %v58, 0
  %162 = vmatprep.subr.mxu0 0.0
  %163 = vmatpush1.msra.mxu0 %v59
  %164 = vmatprep.subr.mxu0 0.0
  %165 = vmatpush1.msra.mxu0 %v60
  %166 = vmatprep.subr.mxu0 0.0
  %167 = vmatpush1.msra.mxu0 0.0
  %168 = vmatprep.subr.mxu0 0.0
  %169 = vmatpush1.msra.mxu0 0.0
  %170 = vmatprep.subr.mxu0 0.0
  %171 = vmatpush1.msra.mxu0 0.0
  %172 = vmatprep.subr.mxu0 0.0
  %173 = vmatpush1.msra.mxu0 0.0
  %174 = vmatprep.subr.mxu0 0.0
  %175 = vmatpush1.msra.mxu0 0.0
  %176 = vmatprep.subr.mxu0 0.0
  %177 = vmatpush1.msra.mxu0 0.0
  %178 = vmatprep.subr.mxu0 0.0
  %179 = vmatpush1.msra.mxu0 0.0
  %180 = vmatprep.subr.mxu0 0.0
  %181 = vmatpush1.msra.mxu0 0.0
  %182 = vmatprep.subr.mxu0 0.0
  %183 = vmatpush1.msra.mxu0 0.0
  %184 = vmatprep.subr.mxu0 0.0
  %185 = vmatpush1.msra.mxu0 0.0
  %186 = vmatprep.subr.mxu0 0.0
  %187 = vmatpush1.msra.mxu0 0.0
  %188 = vmatprep.subr.mxu0 0.0
  %189 = vmatpush1.msra.mxu0 0.0
  %190 = vmatprep.subr.mxu0 0.0
  %191 = vmatpush1.msra.mxu0 0.0
  %192 = vmatprep.subr.mxu0 0.0
  %193 = vmatpush1.msra.mxu0 0.0
  %194 = vmatprep.subr.mxu0 0.0
  %195 = vmatpush1.msra.mxu0 0.0
  %196 = vmatprep.subr.mxu0 0.0
  %197 = vmatpush1.msra.mxu0 0.0
  %198 = vmatprep.subr.mxu0 0.0
  %199 = vmatpush1.msra.mxu0 0.0
  %200 = vmatprep.subr.mxu0 0.0
  %201 = vmatpush1.msra.mxu0 0.0
  %202 = vmatprep.subr.mxu0 0.0
  %203 = vmatpush1.msra.mxu0 0.0
  %204 = vmatprep.subr.mxu0 0.0
  %205 = vmatpush1.msra.mxu0 0.0
  %206 = vmatprep.subr.mxu0 0.0
  %207 = vmatpush1.msra.mxu0 0.0
  %208 = vmatprep.subr.mxu0 0.0
  %209 = vmatpush1.msra.mxu0 0.0
  %210 = vmatprep.subr.mxu0 0.0
  %211 = vmatpush1.msra.mxu0 0.0
  %212 = vmatprep.subr.mxu0 0.0
  %213 = vmatpush1.msra.mxu0 0.0
  %214 = vmatprep.subr.mxu0 0.0
  %215 = vmatpush1.msra.mxu0 0.0
  %216 = vmatprep.subr.mxu0 0.0
  %217 = vmatpush1.msra.mxu0 0.0
  %218 = vmatprep.subr.mxu0 0.0
  %219 = vmatpush1.msra.mxu0 0.0
  %220 = vmatprep.subr.mxu0 0.0
  %221 = vmatpush1.msra.mxu0 0.0
  %222 = vmatprep.subr.mxu0 0.0
  %223 = vmatpush1.msra.mxu0 0.0
  %224 = vmatprep.subr.mxu0 0.0
  %225 = vmatpush1.msra.mxu0 0.0
  %226 = vmatprep.mubr.f32.mxu0 0.0
  %227 = vmatmul.mubr.f32.gmra.mrb[0].mxu0 %v67
  %v228 = vpop.f32.mrb[0].mxu0
  %v229 = vadd.f32 %v64, %v228
  %v230 = vpop.f32.mrb[0].mxu0
  %231 = vmatprep.mubr.f32.mxu0 0.0
  %232 = vmatmul.mubr.f32.gmra.mrb[0].mxu0 %v70
  %v233 = vpop.f32.mrb[0].mxu0
  %v234 = vadd.f32 %v64, %v233
  %v235 = vpop.f32.mrb[0].mxu0
  %236 = vmatprep.mubr.f32.mxu0 0.0
  %237 = vmatmul.mubr.f32.gmra.mrb[0].mxu0 %v73
  %v238 = vpop.f32.mrb[0].mxu0
  %v239 = vadd.f32 %v64, %v238
  %v240 = vpop.f32.mrb[0].mxu0
  %241 = vmatprep.mubr.f32.mxu0 0.0
  %242 = vmatmul.mubr.f32.gmra.mrb[0].mxu0 %v76
  %v243 = vpop.f32.mrb[0].mxu0
  %v244 = vadd.f32 %v64, %v243
  %v245 = vpop.f32.mrb[0].mxu0
  %246 = vmatprep.mubr.f32.mxu0 0.0
  %247 = vmatmul.mubr.f32.gmra.mrb[0].mxu0 %v79
  %v248 = vpop.f32.mrb[0].mxu0
  %v249 = vadd.f32 %v64, %v248
  %v250 = vpop.f32.mrb[0].mxu0
  %251 = vmatprep.mubr.f32.mxu0 0.0
  %252 = vmatmul.mubr.f32.gmra.mrb[0].mxu0 %v82
  %v253 = vpop.f32.mrb[0].mxu0
  %v254 = vadd.f32 %v64, %v253
  %v255 = vpop.f32.mrb[0].mxu0
  %256 = vmatprep.mubr.f32.mxu0 0.0
  %257 = vmatmul.mubr.f32.gmra.mrb[0].mxu0 %v85
  %v258 = vpop.f32.mrb[0].mxu0
  %v259 = vadd.f32 %v64, %v258
  %v260 = vpop.f32.mrb[0].mxu0
  %261 = vmatprep.mubr.f32.mxu0 0.0
  %262 = vmatmul.mubr.f32.gmra.mrb[0].mxu0 %v88
  %v263 = vpop.f32.mrb[0].mxu0
  %v264 = vadd.f32 %v64, %v263
  %v265 = vpop.f32.mrb[0].mxu0
  %266 = vmatprep.mubr.f32.mxu0 0.0
  %267 = vmatmul.mubr.f32.gmra.mrb[0].mxu0 %v91
  %v268 = vpop.f32.mrb[0].mxu0
  %v269 = vadd.f32 %v64, %v268
  %v270 = vpop.f32.mrb[0].mxu0
  %271 = vmatprep.mubr.f32.mxu0 0.0
  %272 = vmatmul.mubr.f32.gmra.mrb[0].mxu0 %v94
  %v273 = vpop.f32.mrb[0].mxu0
  %v274 = vadd.f32 %v64, %v273
  %v275 = vpop.f32.mrb[0].mxu0
  %276 = vmatprep.mubr.f32.mxu0 0.0
  %277 = vmatmul.mubr.f32.gmra.mrb[0].mxu0 %v97
  %v278 = vpop.f32.mrb[0].mxu0
  %v279 = vadd.f32 %v64, %v278
  %v280 = vpop.f32.mrb[0].mxu0
  %281 = vmatprep.mubr.f32.mxu0 0.0
  %282 = vmatmul.mubr.f32.gmra.mrb[0].mxu0 %v100
  %v283 = vpop.f32.mrb[0].mxu0
  %v284 = vadd.f32 %v64, %v283
  %v285 = vpop.f32.mrb[0].mxu0
  %286 = vmatprep.mubr.f32.mxu0 0.0
  %287 = vmatmul.mubr.f32.gmra.mrb[0].mxu0 %v103
  %v288 = vpop.f32.mrb[0].mxu0
  %v289 = vadd.f32 %v64, %v288
  %v290 = vpop.f32.mrb[0].mxu0
  %291 = vmatprep.mubr.f32.mxu0 0.0
  %292 = vmatmul.mubr.f32.gmra.mrb[0].mxu0 %v106
  %v293 = vpop.f32.mrb[0].mxu0
  %v294 = vadd.f32 %v64, %v293
  %v295 = vpop.f32.mrb[0].mxu0
  %296 = vmatprep.mubr.f32.mxu0 0.0
  %297 = vmatmul.mubr.f32.gmra.mrb[0].mxu0 %v109
  %v298 = vpop.f32.mrb[0].mxu0
  %v299 = vadd.f32 %v64, %v298
  %v300 = vpop.f32.mrb[0].mxu0
  %301 = vmatprep.mubr.f32.mxu0 0.0
  %302 = vmatmul.mubr.f32.gmra.mrb[0].mxu0 %v112
  %v303 = vpop.f32.mrb[0].mxu0
  %v304 = vadd.f32 %v64, %v303
  %v305 = vpop.f32.mrb[0].mxu0
  %306 = vmatprep.mubr.f32.mxu0 0.0
  %307 = vmatmul.mubr.f32.gmra.mrb[0].mxu0 %v115
  %v308 = vpop.f32.mrb[0].mxu0
  %v309 = vadd.f32 %v64, %v308
  %v310 = vpop.f32.mrb[0].mxu0
  %311 = vmatprep.mubr.f32.mxu0 0.0
  %312 = vmatmul.mubr.f32.gmra.mrb[0].mxu0 %v118
  %v313 = vpop.f32.mrb[0].mxu0
  %v314 = vadd.f32 %v64, %v313
  %v315 = vpop.f32.mrb[0].mxu0
  %316 = vmatprep.mubr.f32.mxu0 0.0
  %317 = vmatmul.mubr.f32.gmra.mrb[0].mxu0 %v121
  %v318 = vpop.f32.mrb[0].mxu0
  %v319 = vadd.f32 %v64, %v318
  %v320 = vpop.f32.mrb[0].mxu0
  %321 = vmatprep.mubr.f32.mxu0 0.0
  %322 = vmatmul.mubr.f32.gmra.mrb[0].mxu0 %v124
  %v323 = vpop.f32.mrb[0].mxu0
  %v324 = vadd.f32 %v64, %v323
  %v325 = vpop.f32.mrb[0].mxu0
  %326 = vmatprep.mubr.f32.mxu0 0.0
  %327 = vmatmul.mubr.f32.gmra.mrb[0].mxu0 %v127
  %v328 = vpop.f32.mrb[0].mxu0
  %v329 = vadd.f32 %v64, %v328
  %v330 = vpop.f32.mrb[0].mxu0
  %331 = vmatprep.mubr.f32.mxu0 0.0
  %332 = vmatmul.mubr.f32.gmra.mrb[0].mxu0 %v130
  %v333 = vpop.f32.mrb[0].mxu0
  %v334 = vadd.f32 %v64, %v333
  %v335 = vpop.f32.mrb[0].mxu0
  %336 = vmatprep.mubr.f32.mxu0 0.0
  %337 = vmatmul.mubr.f32.gmra.mrb[0].mxu0 %v133
  %v338 = vpop.f32.mrb[0].mxu0
  %v339 = vadd.f32 %v64, %v338
  %v340 = vpop.f32.mrb[0].mxu0
  %341 = vmatprep.mubr.f32.mxu0 0.0
  %342 = vmatmul.mubr.f32.gmra.mrb[0].mxu0 %v136
  %v343 = vpop.f32.mrb[0].mxu0
  %v344 = vadd.f32 %v64, %v343
  %v345 = vpop.f32.mrb[0].mxu0
  %346 = vmatprep.mubr.f32.mxu0 0.0
  %347 = vmatmul.mubr.f32.gmra.mrb[0].mxu0 %v139
  %v348 = vpop.f32.mrb[0].mxu0
  %v349 = vadd.f32 %v64, %v348
  %v350 = vpop.f32.mrb[0].mxu0
  %351 = vmatprep.mubr.f32.mxu0 0.0
  %352 = vmatmul.mubr.f32.gmra.mrb[0].mxu0 %v142
  %v353 = vpop.f32.mrb[0].mxu0
  %v354 = vadd.f32 %v64, %v353
  %v355 = vpop.f32.mrb[0].mxu0
  %356 = vmatprep.mubr.f32.mxu0 0.0
  %357 = vmatmul.mubr.f32.gmra.mrb[0].mxu0 %v145
  %v358 = vpop.f32.mrb[0].mxu0
  %v359 = vadd.f32 %v64, %v358
  %v360 = vpop.f32.mrb[0].mxu0
  %361 = vmatprep.mubr.f32.mxu0 0.0
  %362 = vmatmul.mubr.f32.gmra.mrb[0].mxu0 %v148
  %v363 = vpop.f32.mrb[0].mxu0
  %v364 = vadd.f32 %v64, %v363
  %v365 = vpop.f32.mrb[0].mxu0
  %366 = vmatprep.mubr.f32.mxu0 0.0
  %367 = vmatmul.mubr.f32.gmra.mrb[0].mxu0 %v151
  %v368 = vpop.f32.mrb[0].mxu0
  %v369 = vadd.f32 %v64, %v368
  %v370 = vpop.f32.mrb[0].mxu0
  %371 = vmatprep.mubr.f32.mxu0 0.0
  %372 = vmatmul.mubr.f32.gmra.mrb[0].mxu0 %v154
  %v373 = vpop.f32.mrb[0].mxu0
  %v374 = vadd.f32 %v64, %v373
  %v375 = vpop.f32.mrb[0].mxu0
  %376 = vmatprep.mubr.f32.mxu0 0.0
  %377 = vmatmul.mubr.f32.gmra.mrb[0].mxu0 %v157
  %v378 = vpop.f32.mrb[0].mxu0
  %v379 = vadd.f32 %v64, %v378
  %v380 = vpop.f32.mrb[0].mxu0
  %381 = vmatprep.mubr.f32.mxu0 0.0
  %382 = vmatmul.mubr.f32.gmra.mrb[0].mxu0 %v160
  %v383 = vpop.f32.mrb[0].mxu0
  %v384 = vadd.f32 %v64, %v383
  %v385 = vpop.f32.mrb[0].mxu0
  %386 = vdwg.mxu0
  %vm387 = vcmask 261120
  %v388 = vsel %vm387, %v229, 0.0
  %v389 = vsel %vm387, %v234, 0.0
  %v390 = vadd.f32 %v388, %v389
  %v391 = vsel %vm387, %v239, 0.0
  %v392 = vadd.f32 %v390, %v391
  %v393 = vsel %vm387, %v244, 0.0
  %v394 = vadd.f32 %v392, %v393
  %v395 = vsel %vm387, %v249, 0.0
  %v396 = vadd.f32 %v394, %v395
  %v397 = vsel %vm387, %v254, 0.0
  %v398 = vadd.f32 %v396, %v397
  %v399 = vsel %vm387, %v259, 0.0
  %v400 = vadd.f32 %v398, %v399
  %v401 = vsel %vm387, %v264, 0.0
  %v402 = vadd.f32 %v400, %v401
  %v403 = vsel %vm387, %v269, 0.0
  %v404 = vadd.f32 %v402, %v403
  %v405 = vsel %vm387, %v274, 0.0
  %v406 = vadd.f32 %v404, %v405
  %v407 = vsel %vm387, %v279, 0.0
  %v408 = vadd.f32 %v406, %v407
  %v409 = vsel %vm387, %v284, 0.0
  %v410 = vadd.f32 %v408, %v409
  %v411 = vsel %vm387, %v289, 0.0
  %v412 = vadd.f32 %v410, %v411
  %v413 = vsel %vm387, %v294, 0.0
  %v414 = vadd.f32 %v412, %v413
  %v415 = vsel %vm387, %v299, 0.0
  %v416 = vadd.f32 %v414, %v415
  %v417 = vsel %vm387, %v304, 0.0
  %v418 = vadd.f32 %v416, %v417
  %v419 = vsel %vm387, %v309, 0.0
  %v420 = vadd.f32 %v418, %v419
  %v421 = vsel %vm387, %v314, 0.0
  %v422 = vadd.f32 %v420, %v421
  %v423 = vsel %vm387, %v319, 0.0
  %v424 = vadd.f32 %v422, %v423
  %v425 = vsel %vm387, %v324, 0.0
  %v426 = vadd.f32 %v424, %v425
  %v427 = vsel %vm387, %v329, 0.0
  %v428 = vadd.f32 %v426, %v427
  %v429 = vsel %vm387, %v334, 0.0
  %v430 = vadd.f32 %v428, %v429
  %v431 = vsel %vm387, %v339, 0.0
  %v432 = vadd.f32 %v430, %v431
  %v433 = vsel %vm387, %v344, 0.0
  %v434 = vadd.f32 %v432, %v433
  %v435 = vsel %vm387, %v349, 0.0
  %v436 = vadd.f32 %v434, %v435
  %v437 = vsel %vm387, %v354, 0.0
  %v438 = vadd.f32 %v436, %v437
  %v439 = vsel %vm387, %v359, 0.0
  %v440 = vadd.f32 %v438, %v439
  %v441 = vsel %vm387, %v364, 0.0
  %v442 = vadd.f32 %v440, %v441
  %v443 = vsel %vm387, %v369, 0.0
  %v444 = vadd.f32 %v442, %v443
  %v445 = vsel %vm387, %v374, 0.0
  %v446 = vadd.f32 %v444, %v445
  %v447 = vsel %vm387, %v379, 0.0
  %v448 = vadd.f32 %v446, %v447
  %v449 = vsel %vm387, %v384, 0.0
  %v450 = vadd.f32 %v448, %v449
  %v451 = vrot.slane %v450, 4
  %v452 = vadd.f32 %v450, %v451
  %v453 = vrot.slane %v452, 2
  %v454 = vadd.f32 %v452, %v453
  %v455 = vrot.slane %v454, 1
  %v456 = vadd.f32 %v454, %v455
  %v457 = vmul.f32 %v456, 0.00390625
  %v458 = vsub.f32 %v229, %v457
  %v459 = vsub.f32 %v234, %v457
  %v460 = vsub.f32 %v239, %v457
  %v461 = vsub.f32 %v244, %v457
  %v462 = vsub.f32 %v249, %v457
  %v463 = vsub.f32 %v254, %v457
  %v464 = vsub.f32 %v259, %v457
  %v465 = vsub.f32 %v264, %v457
  %v466 = vsub.f32 %v269, %v457
  %v467 = vsub.f32 %v274, %v457
  %v468 = vsub.f32 %v279, %v457
  %v469 = vsub.f32 %v284, %v457
  %v470 = vsub.f32 %v289, %v457
  %v471 = vsub.f32 %v294, %v457
  %v472 = vsub.f32 %v299, %v457
  %v473 = vsub.f32 %v304, %v457
  %v474 = vsub.f32 %v309, %v457
  %v475 = vsub.f32 %v314, %v457
  %v476 = vsub.f32 %v319, %v457
  %v477 = vsub.f32 %v324, %v457
  %v478 = vsub.f32 %v329, %v457
  %v479 = vsub.f32 %v334, %v457
  %v480 = vsub.f32 %v339, %v457
  %v481 = vsub.f32 %v344, %v457
  %v482 = vsub.f32 %v349, %v457
  %v483 = vsub.f32 %v354, %v457
  %v484 = vsub.f32 %v359, %v457
  %v485 = vsub.f32 %v364, %v457
  %v486 = vsub.f32 %v369, %v457
  %v487 = vsub.f32 %v374, %v457
  %v488 = vsub.f32 %v379, %v457
  %v489 = vsub.f32 %v384, %v457
  %v490 = vmul.f32 %v458, %v458
  %v491 = vmul.f32 %v459, %v459
  %v492 = vmul.f32 %v460, %v460
  %v493 = vmul.f32 %v461, %v461
  %v494 = vmul.f32 %v462, %v462
  %v495 = vmul.f32 %v463, %v463
  %v496 = vmul.f32 %v464, %v464
  %v497 = vmul.f32 %v465, %v465
  %v498 = vmul.f32 %v466, %v466
  %v499 = vmul.f32 %v467, %v467
  %v500 = vmul.f32 %v468, %v468
  %v501 = vmul.f32 %v469, %v469
  %v502 = vmul.f32 %v470, %v470
  %v503 = vmul.f32 %v471, %v471
  %v504 = vmul.f32 %v472, %v472
  %v505 = vmul.f32 %v473, %v473
  %v506 = vmul.f32 %v474, %v474
  %v507 = vmul.f32 %v475, %v475
  %v508 = vmul.f32 %v476, %v476
  %v509 = vmul.f32 %v477, %v477
  %v510 = vmul.f32 %v478, %v478
  %v511 = vmul.f32 %v479, %v479
  %v512 = vmul.f32 %v480, %v480
  %v513 = vmul.f32 %v481, %v481
  %v514 = vmul.f32 %v482, %v482
  %v515 = vmul.f32 %v483, %v483
  %v516 = vmul.f32 %v484, %v484
  %v517 = vmul.f32 %v485, %v485
  %v518 = vmul.f32 %v486, %v486
  %v519 = vmul.f32 %v487, %v487
  %v520 = vmul.f32 %v488, %v488
  %v521 = vmul.f32 %v489, %v489
  %v522 = vsel %vm387, %v490, 0.0
  %v523 = vsel %vm387, %v491, 0.0
  %v524 = vadd.f32 %v522, %v523
  %v525 = vsel %vm387, %v492, 0.0
  %v526 = vadd.f32 %v524, %v525
  %v527 = vsel %vm387, %v493, 0.0
  %v528 = vadd.f32 %v526, %v527
  %v529 = vsel %vm387, %v494, 0.0
  %v530 = vadd.f32 %v528, %v529
  %v531 = vsel %vm387, %v495, 0.0
  %v532 = vadd.f32 %v530, %v531
  %v533 = vsel %vm387, %v496, 0.0
  %v534 = vadd.f32 %v532, %v533
  %v535 = vsel %vm387, %v497, 0.0
  %v536 = vadd.f32 %v534, %v535
  %v537 = vsel %vm387, %v498, 0.0
  %v538 = vadd.f32 %v536, %v537
  %v539 = vsel %vm387, %v499, 0.0
  %v540 = vadd.f32 %v538, %v539
  %v541 = vsel %vm387, %v500, 0.0
  %v542 = vadd.f32 %v540, %v541
  %v543 = vsel %vm387, %v501, 0.0
  %v544 = vadd.f32 %v542, %v543
  %v545 = vsel %vm387, %v502, 0.0
  %v546 = vadd.f32 %v544, %v545
  %v547 = vsel %vm387, %v503, 0.0
  %v548 = vadd.f32 %v546, %v547
  %v549 = vsel %vm387, %v504, 0.0
  %v550 = vadd.f32 %v548, %v549
  %v551 = vsel %vm387, %v505, 0.0
  %v552 = vadd.f32 %v550, %v551
  %v553 = vsel %vm387, %v506, 0.0
  %v554 = vadd.f32 %v552, %v553
  %v555 = vsel %vm387, %v507, 0.0
  %v556 = vadd.f32 %v554, %v555
  %v557 = vsel %vm387, %v508, 0.0
  %v558 = vadd.f32 %v556, %v557
  %v559 = vsel %vm387, %v509, 0.0
  %v560 = vadd.f32 %v558, %v559
  %v561 = vsel %vm387, %v510, 0.0
  %v562 = vadd.f32 %v560, %v561
  %v563 = vsel %vm387, %v511, 0.0
  %v564 = vadd.f32 %v562, %v563
  %v565 = vsel %vm387, %v512, 0.0
  %v566 = vadd.f32 %v564, %v565
  %v567 = vsel %vm387, %v513, 0.0
  %v568 = vadd.f32 %v566, %v567
  %v569 = vsel %vm387, %v514, 0.0
  %v570 = vadd.f32 %v568, %v569
  %v571 = vsel %vm387, %v515, 0.0
  %v572 = vadd.f32 %v570, %v571
  %v573 = vsel %vm387, %v516, 0.0
  %v574 = vadd.f32 %v572, %v573
  %v575 = vsel %vm387, %v517, 0.0
  %v576 = vadd.f32 %v574, %v575
  %v577 = vsel %vm387, %v518, 0.0
  %v578 = vadd.f32 %v576, %v577
  %v579 = vsel %vm387, %v519, 0.0
  %v580 = vadd.f32 %v578, %v579
  %v581 = vsel %vm387, %v520, 0.0
  %v582 = vadd.f32 %v580, %v581
  %v583 = vsel %vm387, %v521, 0.0
  %v584 = vadd.f32 %v582, %v583
  %v585 = vrot.slane %v584, 4
  %v586 = vadd.f32 %v584, %v585
  %v587 = vrot.slane %v586, 2
  %v588 = vadd.f32 %v586, %v587
  %v589 = vrot.slane %v588, 1
  %v590 = vadd.f32 %v588, %v589
  %v591 = vmul.f32 %v590, 0.00390625
  %v592 = vadd.f32 %v591, 1e-05
  %v593 = vrsqrt.pop %v592
  %v594 = vmul.f32 %v21, %v593
  %v595 = vlaneseq
  %v596 = vshrl.u32 %v595, 7
  %v597 = vsub.s32 0, %v596
  %v598 = vrot.slane %v594, %v597
  %v599 = vmul.f32 %v458, %v598
  %v600 = vmul.f32 %v459, %v598
  %v601 = vmul.f32 %v460, %v598
  %v602 = vmul.f32 %v461, %v598
  %v603 = vmul.f32 %v462, %v598
  %v604 = vmul.f32 %v463, %v598
  %v605 = vmul.f32 %v464, %v598
  %v606 = vmul.f32 %v465, %v598
  %v607 = vmul.f32 %v466, %v598
  %v608 = vmul.f32 %v467, %v598
  %v609 = vmul.f32 %v468, %v598
  %v610 = vmul.f32 %v469, %v598
  %v611 = vmul.f32 %v470, %v598
  %v612 = vmul.f32 %v471, %v598
  %v613 = vmul.f32 %v472, %v598
  %v614 = vmul.f32 %v473, %v598
  %v615 = vmul.f32 %v474, %v598
  %v616 = vmul.f32 %v475, %v598
  %v617 = vmul.f32 %v476, %v598
  %v618 = vmul.f32 %v477, %v598
  %v619 = vmul.f32 %v478, %v598
  %v620 = vmul.f32 %v479, %v598
  %v621 = vmul.f32 %v480, %v598
  %v622 = vmul.f32 %v481, %v598
  %v623 = vmul.f32 %v482, %v598
  %v624 = vmul.f32 %v483, %v598
  %v625 = vmul.f32 %v484, %v598
  %v626 = vmul.f32 %v485, %v598
  %v627 = vmul.f32 %v486, %v598
  %v628 = vmul.f32 %v487, %v598
  %v629 = vmul.f32 %v488, %v598
  %v630 = vmul.f32 %v489, %v598
  %v631 = vlaneseq
  %v632 = vshrl.u32 %v631, 7
  %v633 = vsub.s32 0, %v632
  %v634 = vrot.slane %v22, %v633
  %v635 = vadd.f32 %v599, %v634
  %v636 = vadd.f32 %v600, %v634
  %v637 = vadd.f32 %v601, %v634
  %v638 = vadd.f32 %v602, %v634
  %v639 = vadd.f32 %v603, %v634
  %v640 = vadd.f32 %v604, %v634
  %v641 = vadd.f32 %v605, %v634
  %v642 = vadd.f32 %v606, %v634
  %v643 = vadd.f32 %v607, %v634
  %v644 = vadd.f32 %v608, %v634
  %v645 = vadd.f32 %v609, %v634
  %v646 = vadd.f32 %v610, %v634
  %v647 = vadd.f32 %v611, %v634
  %v648 = vadd.f32 %v612, %v634
  %v649 = vadd.f32 %v613, %v634
  %v650 = vadd.f32 %v614, %v634
  %v651 = vadd.f32 %v615, %v634
  %v652 = vadd.f32 %v616, %v634
  %v653 = vadd.f32 %v617, %v634
  %v654 = vadd.f32 %v618, %v634
  %v655 = vadd.f32 %v619, %v634
  %v656 = vadd.f32 %v620, %v634
  %v657 = vadd.f32 %v621, %v634
  %v658 = vadd.f32 %v622, %v634
  %v659 = vadd.f32 %v623, %v634
  %v660 = vadd.f32 %v624, %v634
  %v661 = vadd.f32 %v625, %v634
  %v662 = vadd.f32 %v626, %v634
  %v663 = vadd.f32 %v627, %v634
  %v664 = vadd.f32 %v628, %v634
  %v665 = vadd.f32 %v629, %v634
  %v666 = vadd.f32 %v630, %v634
  %v667 = vmax.f32 %v635, 0.0
  %v668 = vmax.f32 %v636, 0.0
  %v669 = vmax.f32 %v637, 0.0
  %v670 = vmax.f32 %v638, 0.0
  %v671 = vmax.f32 %v639, 0.0
  %v672 = vmax.f32 %v640, 0.0
  %v673 = vmax.f32 %v641, 0.0
  %v674 = vmax.f32 %v642, 0.0
  %v675 = vmax.f32 %v643, 0.0
  %v676 = vmax.f32 %v644, 0.0
  %v677 = vmax.f32 %v645, 0.0
  %v678 = vmax.f32 %v646, 0.0
  %v679 = vmax.f32 %v647, 0.0
  %v680 = vmax.f32 %v648, 0.0
  %v681 = vmax.f32 %v649, 0.0
  %v682 = vmax.f32 %v650, 0.0
  %v683 = vmax.f32 %v651, 0.0
  %v684 = vmax.f32 %v652, 0.0
  %v685 = vmax.f32 %v653, 0.0
  %v686 = vmax.f32 %v654, 0.0
  %v687 = vmax.f32 %v655, 0.0
  %v688 = vmax.f32 %v656, 0.0
  %v689 = vmax.f32 %v657, 0.0
  %v690 = vmax.f32 %v658, 0.0
  %v691 = vmax.f32 %v659, 0.0
  %v692 = vmax.f32 %v660, 0.0
  %v693 = vmax.f32 %v661, 0.0
  %v694 = vmax.f32 %v662, 0.0
  %v695 = vmax.f32 %v663, 0.0
  %v696 = vmax.f32 %v664, 0.0
  %v697 = vmax.f32 %v665, 0.0
  %v698 = vmax.f32 %v666, 0.0
  %v699 = vld [vmem:[%s2] sm:$0xff]
  %v700 = vld [vmem:[%s2 + $0x8] sm:$0xff]
  %v701 = vld [vmem:[%s2 + $0x10] sm:$0xff]
  %v702 = vld [vmem:[%s2 + $0x18] sm:$0xff]
  %v703 = vlaneseq
  %v704 = vshrl.u32 %v703, 7
  %v705 = vsub.s32 0, %v704
  %v706 = vrot.slane %v23, %v705
  %v708 = vsel %vm387, %v667, 0
  %v711 = vsel %vm387, %v668, 0
  %v714 = vsel %vm387, %v669, 0
  %v717 = vsel %vm387, %v670, 0
  %v720 = vsel %vm387, %v671, 0
  %v723 = vsel %vm387, %v672, 0
  %v726 = vsel %vm387, %v673, 0
  %v729 = vsel %vm387, %v674, 0
  %v732 = vsel %vm387, %v675, 0
  %v735 = vsel %vm387, %v676, 0
  %v738 = vsel %vm387, %v677, 0
  %v741 = vsel %vm387, %v678, 0
  %v744 = vsel %vm387, %v679, 0
  %v747 = vsel %vm387, %v680, 0
  %v750 = vsel %vm387, %v681, 0
  %v753 = vsel %vm387, %v682, 0
  %v756 = vsel %vm387, %v683, 0
  %v759 = vsel %vm387, %v684, 0
  %v762 = vsel %vm387, %v685, 0
  %v765 = vsel %vm387, %v686, 0
  %v768 = vsel %vm387, %v687, 0
  %v771 = vsel %vm387, %v688, 0
  %v774 = vsel %vm387, %v689, 0
  %v777 = vsel %vm387, %v690, 0
  %v780 = vsel %vm387, %v691, 0
  %v783 = vsel %vm387, %v692, 0
  %v786 = vsel %vm387, %v693, 0
  %v789 = vsel %vm387, %v694, 0
  %v792 = vsel %vm387, %v695, 0
  %v795 = vsel %vm387, %v696, 0
  %v798 = vsel %vm387, %v697, 0
  %v801 = vsel %vm387, %v698, 0
  %803 = vmatprep.subr.mxu0 0.0
  %804 = vmatpush1.msra.mxu0 %v699
  %805 = vmatprep.subr.mxu0 0.0
  %806 = vmatpush1.msra.mxu0 %v700
  %807 = vmatprep.subr.mxu0 0.0
  %808 = vmatpush1.msra.mxu0 %v701
  %809 = vmatprep.subr.mxu0 0.0
  %810 = vmatpush1.msra.mxu0 %v702
  %811 = vmatprep.subr.mxu0 0.0
  %812 = vmatpush1.msra.mxu0 0.0
  %813 = vmatprep.subr.mxu0 0.0
  %814 = vmatpush1.msra.mxu0 0.0
  %815 = vmatprep.subr.mxu0 0.0
  %816 = vmatpush1.msra.mxu0 0.0
  %817 = vmatprep.subr.mxu0 0.0
  %818 = vmatpush1.msra.mxu0 0.0
  %819 = vmatprep.subr.mxu0 0.0
  %820 = vmatpush1.msra.mxu0 0.0
  %821 = vmatprep.subr.mxu0 0.0
  %822 = vmatpush1.msra.mxu0 0.0
  %823 = vmatprep.subr.mxu0 0.0
  %824 = vmatpush1.msra.mxu0 0.0
  %825 = vmatprep.subr.mxu0 0.0
  %826 = vmatpush1.msra.mxu0 0.0
  %827 = vmatprep.subr.mxu0 0.0
  %828 = vmatpush1.msra.mxu0 0.0
  %829 = vmatprep.subr.mxu0 0.0
  %830 = vmatpush1.msra.mxu0 0.0
  %831 = vmatprep.subr.mxu0 0.0
  %832 = vmatpush1.msra.mxu0 0.0
  %833 = vmatprep.subr.mxu0 0.0
  %834 = vmatpush1.msra.mxu0 0.0
  %835 = vmatprep.subr.mxu0 0.0
  %836 = vmatpush1.msra.mxu0 0.0
  %837 = vmatprep.subr.mxu0 0.0
  %838 = vmatpush1.msra.mxu0 0.0
  %839 = vmatprep.subr.mxu0 0.0
  %840 = vmatpush1.msra.mxu0 0.0
  %841 = vmatprep.subr.mxu0 0.0
  %842 = vmatpush1.msra.mxu0 0.0
  %843 = vmatprep.subr.mxu0 0.0
  %844 = vmatpush1.msra.mxu0 0.0
  %845 = vmatprep.subr.mxu0 0.0
  %846 = vmatpush1.msra.mxu0 0.0
  %847 = vmatprep.subr.mxu0 0.0
  %848 = vmatpush1.msra.mxu0 0.0
  %849 = vmatprep.subr.mxu0 0.0
  %850 = vmatpush1.msra.mxu0 0.0
  %851 = vmatprep.subr.mxu0 0.0
  %852 = vmatpush1.msra.mxu0 0.0
  %853 = vmatprep.subr.mxu0 0.0
  %854 = vmatpush1.msra.mxu0 0.0
  %855 = vmatprep.subr.mxu0 0.0
  %856 = vmatpush1.msra.mxu0 0.0
  %857 = vmatprep.subr.mxu0 0.0
  %858 = vmatpush1.msra.mxu0 0.0
  %859 = vmatprep.subr.mxu0 0.0
  %860 = vmatpush1.msra.mxu0 0.0
  %861 = vmatprep.subr.mxu0 0.0
  %862 = vmatpush1.msra.mxu0 0.0
  %863 = vmatprep.subr.mxu0 0.0
  %864 = vmatpush1.msra.mxu0 0.0
  %865 = vmatprep.subr.mxu0 0.0
  %866 = vmatpush1.msra.mxu0 0.0
  %867 = vmatprep.mubr.f32.mxu0 0.0
  %868 = vmatmul.mubr.f32.gmra.mrb[0].mxu0 %v708
  %v869 = vpop.f32.mrb[0].mxu0
  %v870 = vadd.f32 %v706, %v869
  %v871 = vpop.f32.mrb[0].mxu0
  %872 = vmatprep.mubr.f32.mxu0 0.0
  %873 = vmatmul.mubr.f32.gmra.mrb[0].mxu0 %v711
  %v874 = vpop.f32.mrb[0].mxu0
  %v875 = vadd.f32 %v706, %v874
  %v876 = vpop.f32.mrb[0].mxu0
  %877 = vmatprep.mubr.f32.mxu0 0.0
  %878 = vmatmul.mubr.f32.gmra.mrb[0].mxu0 %v714
  %v879 = vpop.f32.mrb[0].mxu0
  %v880 = vadd.f32 %v706, %v879
  %v881 = vpop.f32.mrb[0].mxu0
  %882 = vmatprep.mubr.f32.mxu0 0.0
  %883 = vmatmul.mubr.f32.gmra.mrb[0].mxu0 %v717
  %v884 = vpop.f32.mrb[0].mxu0
  %v885 = vadd.f32 %v706, %v884
  %v886 = vpop.f32.mrb[0].mxu0
  %887 = vmatprep.mubr.f32.mxu0 0.0
  %888 = vmatmul.mubr.f32.gmra.mrb[0].mxu0 %v720
  %v889 = vpop.f32.mrb[0].mxu0
  %v890 = vadd.f32 %v706, %v889
  %v891 = vpop.f32.mrb[0].mxu0
  %892 = vmatprep.mubr.f32.mxu0 0.0
  %893 = vmatmul.mubr.f32.gmra.mrb[0].mxu0 %v723
  %v894 = vpop.f32.mrb[0].mxu0
  %v895 = vadd.f32 %v706, %v894
  %v896 = vpop.f32.mrb[0].mxu0
  %897 = vmatprep.mubr.f32.mxu0 0.0
  %898 = vmatmul.mubr.f32.gmra.mrb[0].mxu0 %v726
  %v899 = vpop.f32.mrb[0].mxu0
  %v900 = vadd.f32 %v706, %v899
  %v901 = vpop.f32.mrb[0].mxu0
  %902 = vmatprep.mubr.f32.mxu0 0.0
  %903 = vmatmul.mubr.f32.gmra.mrb[0].mxu0 %v729
  %v904 = vpop.f32.mrb[0].mxu0
  %v905 = vadd.f32 %v706, %v904
  %v906 = vpop.f32.mrb[0].mxu0
  %907 = vmatprep.mubr.f32.mxu0 0.0
  %908 = vmatmul.mubr.f32.gmra.mrb[0].mxu0 %v732
  %v909 = vpop.f32.mrb[0].mxu0
  %v910 = vadd.f32 %v706, %v909
  %v911 = vpop.f32.mrb[0].mxu0
  %912 = vmatprep.mubr.f32.mxu0 0.0
  %913 = vmatmul.mubr.f32.gmra.mrb[0].mxu0 %v735
  %v914 = vpop.f32.mrb[0].mxu0
  %v915 = vadd.f32 %v706, %v914
  %v916 = vpop.f32.mrb[0].mxu0
  %917 = vmatprep.mubr.f32.mxu0 0.0
  %918 = vmatmul.mubr.f32.gmra.mrb[0].mxu0 %v738
  %v919 = vpop.f32.mrb[0].mxu0
  %v920 = vadd.f32 %v706, %v919
  %v921 = vpop.f32.mrb[0].mxu0
  %922 = vmatprep.mubr.f32.mxu0 0.0
  %923 = vmatmul.mubr.f32.gmra.mrb[0].mxu0 %v741
  %v924 = vpop.f32.mrb[0].mxu0
  %v925 = vadd.f32 %v706, %v924
  %v926 = vpop.f32.mrb[0].mxu0
  %927 = vmatprep.mubr.f32.mxu0 0.0
  %928 = vmatmul.mubr.f32.gmra.mrb[0].mxu0 %v744
  %v929 = vpop.f32.mrb[0].mxu0
  %v930 = vadd.f32 %v706, %v929
  %v931 = vpop.f32.mrb[0].mxu0
  %932 = vmatprep.mubr.f32.mxu0 0.0
  %933 = vmatmul.mubr.f32.gmra.mrb[0].mxu0 %v747
  %v934 = vpop.f32.mrb[0].mxu0
  %v935 = vadd.f32 %v706, %v934
  %v936 = vpop.f32.mrb[0].mxu0
  %937 = vmatprep.mubr.f32.mxu0 0.0
  %938 = vmatmul.mubr.f32.gmra.mrb[0].mxu0 %v750
  %v939 = vpop.f32.mrb[0].mxu0
  %v940 = vadd.f32 %v706, %v939
  %v941 = vpop.f32.mrb[0].mxu0
  %942 = vmatprep.mubr.f32.mxu0 0.0
  %943 = vmatmul.mubr.f32.gmra.mrb[0].mxu0 %v753
  %v944 = vpop.f32.mrb[0].mxu0
  %v945 = vadd.f32 %v706, %v944
  %v946 = vpop.f32.mrb[0].mxu0
  %947 = vmatprep.mubr.f32.mxu0 0.0
  %948 = vmatmul.mubr.f32.gmra.mrb[0].mxu0 %v756
  %v949 = vpop.f32.mrb[0].mxu0
  %v950 = vadd.f32 %v706, %v949
  %v951 = vpop.f32.mrb[0].mxu0
  %952 = vmatprep.mubr.f32.mxu0 0.0
  %953 = vmatmul.mubr.f32.gmra.mrb[0].mxu0 %v759
  %v954 = vpop.f32.mrb[0].mxu0
  %v955 = vadd.f32 %v706, %v954
  %v956 = vpop.f32.mrb[0].mxu0
  %957 = vmatprep.mubr.f32.mxu0 0.0
  %958 = vmatmul.mubr.f32.gmra.mrb[0].mxu0 %v762
  %v959 = vpop.f32.mrb[0].mxu0
  %v960 = vadd.f32 %v706, %v959
  %v961 = vpop.f32.mrb[0].mxu0
  %962 = vmatprep.mubr.f32.mxu0 0.0
  %963 = vmatmul.mubr.f32.gmra.mrb[0].mxu0 %v765
  %v964 = vpop.f32.mrb[0].mxu0
  %v965 = vadd.f32 %v706, %v964
  %v966 = vpop.f32.mrb[0].mxu0
  %967 = vmatprep.mubr.f32.mxu0 0.0
  %968 = vmatmul.mubr.f32.gmra.mrb[0].mxu0 %v768
  %v969 = vpop.f32.mrb[0].mxu0
  %v970 = vadd.f32 %v706, %v969
  %v971 = vpop.f32.mrb[0].mxu0
  %972 = vmatprep.mubr.f32.mxu0 0.0
  %973 = vmatmul.mubr.f32.gmra.mrb[0].mxu0 %v771
  %v974 = vpop.f32.mrb[0].mxu0
  %v975 = vadd.f32 %v706, %v974
  %v976 = vpop.f32.mrb[0].mxu0
  %977 = vmatprep.mubr.f32.mxu0 0.0
  %978 = vmatmul.mubr.f32.gmra.mrb[0].mxu0 %v774
  %v979 = vpop.f32.mrb[0].mxu0
  %v980 = vadd.f32 %v706, %v979
  %v981 = vpop.f32.mrb[0].mxu0
  %982 = vmatprep.mubr.f32.mxu0 0.0
  %983 = vmatmul.mubr.f32.gmra.mrb[0].mxu0 %v777
  %v984 = vpop.f32.mrb[0].mxu0
  %v985 = vadd.f32 %v706, %v984
  %v986 = vpop.f32.mrb[0].mxu0
  %987 = vmatprep.mubr.f32.mxu0 0.0
  %988 = vmatmul.mubr.f32.gmra.mrb[0].mxu0 %v780
  %v989 = vpop.f32.mrb[0].mxu0
  %v990 = vadd.f32 %v706, %v989
  %v991 = vpop.f32.mrb[0].mxu0
  %992 = vmatprep.mubr.f32.mxu0 0.0
  %993 = vmatmul.mubr.f32.gmra.mrb[0].mxu0 %v783
  %v994 = vpop.f32.mrb[0].mxu0
  %v995 = vadd.f32 %v706, %v994
  %v996 = vpop.f32.mrb[0].mxu0
  %997 = vmatprep.mubr.f32.mxu0 0.0
  %998 = vmatmul.mubr.f32.gmra.mrb[0].mxu0 %v786
  %v999 = vpop.f32.mrb[0].mxu0
  %v1000 = vadd.f32 %v706, %v999
  %v1001 = vpop.f32.mrb[0].mxu0
  %1002 = vmatprep.mubr.f32.mxu0 0.0
  %1003 = vmatmul.mubr.f32.gmra.mrb[0].mxu0 %v789
  %v1004 = vpop.f32.mrb[0].mxu0
  %v1005 = vadd.f32 %v706, %v1004
  %v1006 = vpop.f32.mrb[0].mxu0
  %1007 = vmatprep.mubr.f32.mxu0 0.0
  %1008 = vmatmul.mubr.f32.gmra.mrb[0].mxu0 %v792
  %v1009 = vpop.f32.mrb[0].mxu0
  %v1010 = vadd.f32 %v706, %v1009
  %v1011 = vpop.f32.mrb[0].mxu0
  %1012 = vmatprep.mubr.f32.mxu0 0.0
  %1013 = vmatmul.mubr.f32.gmra.mrb[0].mxu0 %v795
  %v1014 = vpop.f32.mrb[0].mxu0
  %v1015 = vadd.f32 %v706, %v1014
  %v1016 = vpop.f32.mrb[0].mxu0
  %1017 = vmatprep.mubr.f32.mxu0 0.0
  %1018 = vmatmul.mubr.f32.gmra.mrb[0].mxu0 %v798
  %v1019 = vpop.f32.mrb[0].mxu0
  %v1020 = vadd.f32 %v706, %v1019
  %v1021 = vpop.f32.mrb[0].mxu0
  %1022 = vmatprep.mubr.f32.mxu0 0.0
  %1023 = vmatmul.mubr.f32.gmra.mrb[0].mxu0 %v801
  %v1024 = vpop.f32.mrb[0].mxu0
  %v1025 = vadd.f32 %v706, %v1024
  %v1026 = vpop.f32.mrb[0].mxu0
  %1027 = vdwg.mxu0
  %vm1028 = vcmask 523264
  %v1029 = vsel %vm1028, %v870, 0.0
  %v1030 = vsel %vm1028, %v875, 0.0
  %v1031 = vadd.f32 %v1029, %v1030
  %v1032 = vsel %vm1028, %v880, 0.0
  %v1033 = vadd.f32 %v1031, %v1032
  %v1034 = vsel %vm1028, %v885, 0.0
  %v1035 = vadd.f32 %v1033, %v1034
  %v1036 = vsel %vm1028, %v890, 0.0
  %v1037 = vadd.f32 %v1035, %v1036
  %v1038 = vsel %vm1028, %v895, 0.0
  %v1039 = vadd.f32 %v1037, %v1038
  %v1040 = vsel %vm1028, %v900, 0.0
  %v1041 = vadd.f32 %v1039, %v1040
  %v1042 = vsel %vm1028, %v905, 0.0
  %v1043 = vadd.f32 %v1041, %v1042
  %v1044 = vsel %vm1028, %v910, 0.0
  %v1045 = vadd.f32 %v1043, %v1044
  %v1046 = vsel %vm1028, %v915, 0.0
  %v1047 = vadd.f32 %v1045, %v1046
  %v1048 = vsel %vm1028, %v920, 0.0
  %v1049 = vadd.f32 %v1047, %v1048
  %v1050 = vsel %vm1028, %v925, 0.0
  %v1051 = vadd.f32 %v1049, %v1050
  %v1052 = vsel %vm1028, %v930, 0.0
  %v1053 = vadd.f32 %v1051, %v1052
  %v1054 = vsel %vm1028, %v935, 0.0
  %v1055 = vadd.f32 %v1053, %v1054
  %v1056 = vsel %vm1028, %v940, 0.0
  %v1057 = vadd.f32 %v1055, %v1056
  %v1058 = vsel %vm1028, %v945, 0.0
  %v1059 = vadd.f32 %v1057, %v1058
  %v1060 = vsel %vm1028, %v950, 0.0
  %v1061 = vadd.f32 %v1059, %v1060
  %v1062 = vsel %vm1028, %v955, 0.0
  %v1063 = vadd.f32 %v1061, %v1062
  %v1064 = vsel %vm1028, %v960, 0.0
  %v1065 = vadd.f32 %v1063, %v1064
  %v1066 = vsel %vm1028, %v965, 0.0
  %v1067 = vadd.f32 %v1065, %v1066
  %v1068 = vsel %vm1028, %v970, 0.0
  %v1069 = vadd.f32 %v1067, %v1068
  %v1070 = vsel %vm1028, %v975, 0.0
  %v1071 = vadd.f32 %v1069, %v1070
  %v1072 = vsel %vm1028, %v980, 0.0
  %v1073 = vadd.f32 %v1071, %v1072
  %v1074 = vsel %vm1028, %v985, 0.0
  %v1075 = vadd.f32 %v1073, %v1074
  %v1076 = vsel %vm1028, %v990, 0.0
  %v1077 = vadd.f32 %v1075, %v1076
  %v1078 = vsel %vm1028, %v995, 0.0
  %v1079 = vadd.f32 %v1077, %v1078
  %v1080 = vsel %vm1028, %v1000, 0.0
  %v1081 = vadd.f32 %v1079, %v1080
  %v1082 = vsel %vm1028, %v1005, 0.0
  %v1083 = vadd.f32 %v1081, %v1082
  %v1084 = vsel %vm1028, %v1010, 0.0
  %v1085 = vadd.f32 %v1083, %v1084
  %v1086 = vsel %vm1028, %v1015, 0.0
  %v1087 = vadd.f32 %v1085, %v1086
  %v1088 = vsel %vm1028, %v1020, 0.0
  %v1089 = vadd.f32 %v1087, %v1088
  %v1090 = vsel %vm1028, %v1025, 0.0
  %v1091 = vadd.f32 %v1089, %v1090
  %v1092 = vrot.slane %v1091, 4
  %v1093 = vadd.f32 %v1091, %v1092
  %v1094 = vrot.slane %v1093, 2
  %v1095 = vadd.f32 %v1093, %v1094
  %v1096 = vrot.slane %v1095, 1
  %v1097 = vadd.f32 %v1095, %v1096
  %v1098 = vmul.f32 %v1097, 0.00390625
  %v1099 = vsub.f32 %v870, %v1098
  %v1100 = vsub.f32 %v875, %v1098
  %v1101 = vsub.f32 %v880, %v1098
  %v1102 = vsub.f32 %v885, %v1098
  %v1103 = vsub.f32 %v890, %v1098
  %v1104 = vsub.f32 %v895, %v1098
  %v1105 = vsub.f32 %v900, %v1098
  %v1106 = vsub.f32 %v905, %v1098
  %v1107 = vsub.f32 %v910, %v1098
  %v1108 = vsub.f32 %v915, %v1098
  %v1109 = vsub.f32 %v920, %v1098
  %v1110 = vsub.f32 %v925, %v1098
  %v1111 = vsub.f32 %v930, %v1098
  %v1112 = vsub.f32 %v935, %v1098
  %v1113 = vsub.f32 %v940, %v1098
  %v1114 = vsub.f32 %v945, %v1098
  %v1115 = vsub.f32 %v950, %v1098
  %v1116 = vsub.f32 %v955, %v1098
  %v1117 = vsub.f32 %v960, %v1098
  %v1118 = vsub.f32 %v965, %v1098
  %v1119 = vsub.f32 %v970, %v1098
  %v1120 = vsub.f32 %v975, %v1098
  %v1121 = vsub.f32 %v980, %v1098
  %v1122 = vsub.f32 %v985, %v1098
  %v1123 = vsub.f32 %v990, %v1098
  %v1124 = vsub.f32 %v995, %v1098
  %v1125 = vsub.f32 %v1000, %v1098
  %v1126 = vsub.f32 %v1005, %v1098
  %v1127 = vsub.f32 %v1010, %v1098
  %v1128 = vsub.f32 %v1015, %v1098
  %v1129 = vsub.f32 %v1020, %v1098
  %v1130 = vsub.f32 %v1025, %v1098
  %v1131 = vmul.f32 %v1099, %v1099
  %v1132 = vmul.f32 %v1100, %v1100
  %v1133 = vmul.f32 %v1101, %v1101
  %v1134 = vmul.f32 %v1102, %v1102
  %v1135 = vmul.f32 %v1103, %v1103
  %v1136 = vmul.f32 %v1104, %v1104
  %v1137 = vmul.f32 %v1105, %v1105
  %v1138 = vmul.f32 %v1106, %v1106
  %v1139 = vmul.f32 %v1107, %v1107
  %v1140 = vmul.f32 %v1108, %v1108
  %v1141 = vmul.f32 %v1109, %v1109
  %v1142 = vmul.f32 %v1110, %v1110
  %v1143 = vmul.f32 %v1111, %v1111
  %v1144 = vmul.f32 %v1112, %v1112
  %v1145 = vmul.f32 %v1113, %v1113
  %v1146 = vmul.f32 %v1114, %v1114
  %v1147 = vmul.f32 %v1115, %v1115
  %v1148 = vmul.f32 %v1116, %v1116
  %v1149 = vmul.f32 %v1117, %v1117
  %v1150 = vmul.f32 %v1118, %v1118
  %v1151 = vmul.f32 %v1119, %v1119
  %v1152 = vmul.f32 %v1120, %v1120
  %v1153 = vmul.f32 %v1121, %v1121
  %v1154 = vmul.f32 %v1122, %v1122
  %v1155 = vmul.f32 %v1123, %v1123
  %v1156 = vmul.f32 %v1124, %v1124
  %v1157 = vmul.f32 %v1125, %v1125
  %v1158 = vmul.f32 %v1126, %v1126
  %v1159 = vmul.f32 %v1127, %v1127
  %v1160 = vmul.f32 %v1128, %v1128
  %v1161 = vmul.f32 %v1129, %v1129
  %v1162 = vmul.f32 %v1130, %v1130
  %v1163 = vsel %vm1028, %v1131, 0.0
  %v1164 = vsel %vm1028, %v1132, 0.0
  %v1165 = vadd.f32 %v1163, %v1164
  %v1166 = vsel %vm1028, %v1133, 0.0
  %v1167 = vadd.f32 %v1165, %v1166
  %v1168 = vsel %vm1028, %v1134, 0.0
  %v1169 = vadd.f32 %v1167, %v1168
  %v1170 = vsel %vm1028, %v1135, 0.0
  %v1171 = vadd.f32 %v1169, %v1170
  %v1172 = vsel %vm1028, %v1136, 0.0
  %v1173 = vadd.f32 %v1171, %v1172
  %v1174 = vsel %vm1028, %v1137, 0.0
  %v1175 = vadd.f32 %v1173, %v1174
  %v1176 = vsel %vm1028, %v1138, 0.0
  %v1177 = vadd.f32 %v1175, %v1176
  %v1178 = vsel %vm1028, %v1139, 0.0
  %v1179 = vadd.f32 %v1177, %v1178
  %v1180 = vsel %vm1028, %v1140, 0.0
  %v1181 = vadd.f32 %v1179, %v1180
  %v1182 = vsel %vm1028, %v1141, 0.0
  %v1183 = vadd.f32 %v1181, %v1182
  %v1184 = vsel %vm1028, %v1142, 0.0
  %v1185 = vadd.f32 %v1183, %v1184
  %v1186 = vsel %vm1028, %v1143, 0.0
  %v1187 = vadd.f32 %v1185, %v1186
  %v1188 = vsel %vm1028, %v1144, 0.0
  %v1189 = vadd.f32 %v1187, %v1188
  %v1190 = vsel %vm1028, %v1145, 0.0
  %v1191 = vadd.f32 %v1189, %v1190
  %v1192 = vsel %vm1028, %v1146, 0.0
  %v1193 = vadd.f32 %v1191, %v1192
  %v1194 = vsel %vm1028, %v1147, 0.0
  %v1195 = vadd.f32 %v1193, %v1194
  %v1196 = vsel %vm1028, %v1148, 0.0
  %v1197 = vadd.f32 %v1195, %v1196
  %v1198 = vsel %vm1028, %v1149, 0.0
  %v1199 = vadd.f32 %v1197, %v1198
  %v1200 = vsel %vm1028, %v1150, 0.0
  %v1201 = vadd.f32 %v1199, %v1200
  %v1202 = vsel %vm1028, %v1151, 0.0
  %v1203 = vadd.f32 %v1201, %v1202
  %v1204 = vsel %vm1028, %v1152, 0.0
  %v1205 = vadd.f32 %v1203, %v1204
  %v1206 = vsel %vm1028, %v1153, 0.0
  %v1207 = vadd.f32 %v1205, %v1206
  %v1208 = vsel %vm1028, %v1154, 0.0
  %v1209 = vadd.f32 %v1207, %v1208
  %v1210 = vsel %vm1028, %v1155, 0.0
  %v1211 = vadd.f32 %v1209, %v1210
  %v1212 = vsel %vm1028, %v1156, 0.0
  %v1213 = vadd.f32 %v1211, %v1212
  %v1214 = vsel %vm1028, %v1157, 0.0
  %v1215 = vadd.f32 %v1213, %v1214
  %v1216 = vsel %vm1028, %v1158, 0.0
  %v1217 = vadd.f32 %v1215, %v1216
  %v1218 = vsel %vm1028, %v1159, 0.0
  %v1219 = vadd.f32 %v1217, %v1218
  %v1220 = vsel %vm1028, %v1160, 0.0
  %v1221 = vadd.f32 %v1219, %v1220
  %v1222 = vsel %vm1028, %v1161, 0.0
  %v1223 = vadd.f32 %v1221, %v1222
  %v1224 = vsel %vm1028, %v1162, 0.0
  %v1225 = vadd.f32 %v1223, %v1224
  %v1226 = vrot.slane %v1225, 4
  %v1227 = vadd.f32 %v1225, %v1226
  %v1228 = vrot.slane %v1227, 2
  %v1229 = vadd.f32 %v1227, %v1228
  %v1230 = vrot.slane %v1229, 1
  %v1231 = vadd.f32 %v1229, %v1230
  %v1232 = vmul.f32 %v1231, 0.00390625
  %v1233 = vadd.f32 %v1232, 1e-05
  %v1234 = vrsqrt.pop %v1233
  %v1235 = vmul.f32 %v24, %v1234
  %v1236 = vlaneseq
  %v1237 = vshrl.u32 %v1236, 7
  %v1238 = vsub.s32 0, %v1237
  %v1239 = vrot.slane %v1235, %v1238
  %v1240 = vmul.f32 %v1099, %v1239
  %v1241 = vmul.f32 %v1100, %v1239
  %v1242 = vmul.f32 %v1101, %v1239
  %v1243 = vmul.f32 %v1102, %v1239
  %v1244 = vmul.f32 %v1103, %v1239
  %v1245 = vmul.f32 %v1104, %v1239
  %v1246 = vmul.f32 %v1105, %v1239
  %v1247 = vmul.f32 %v1106, %v1239
  %v1248 = vmul.f32 %v1107, %v1239
  %v1249 = vmul.f32 %v1108, %v1239
  %v1250 = vmul.f32 %v1109, %v1239
  %v1251 = vmul.f32 %v1110, %v1239
  %v1252 = vmul.f32 %v1111, %v1239
  %v1253 = vmul.f32 %v1112, %v1239
  %v1254 = vmul.f32 %v1113, %v1239
  %v1255 = vmul.f32 %v1114, %v1239
  %v1256 = vmul.f32 %v1115, %v1239
  %v1257 = vmul.f32 %v1116, %v1239
  %v1258 = vmul.f32 %v1117, %v1239
  %v1259 = vmul.f32 %v1118, %v1239
  %v1260 = vmul.f32 %v1119, %v1239
  %v1261 = vmul.f32 %v1120, %v1239
  %v1262 = vmul.f32 %v1121, %v1239
  %v1263 = vmul.f32 %v1122, %v1239
  %v1264 = vmul.f32 %v1123, %v1239
  %v1265 = vmul.f32 %v1124, %v1239
  %v1266 = vmul.f32 %v1125, %v1239
  %v1267 = vmul.f32 %v1126, %v1239
  %v1268 = vmul.f32 %v1127, %v1239
  %v1269 = vmul.f32 %v1128, %v1239
  %v1270 = vmul.f32 %v1129, %v1239
  %v1271 = vmul.f32 %v1130, %v1239
  %v1272 = vlaneseq
  %v1273 = vshrl.u32 %v1272, 7
  %v1274 = vsub.s32 0, %v1273
  %v1275 = vrot.slane %v25, %v1274
  %v1276 = vadd.f32 %v1240, %v1275
  %v1277 = vadd.f32 %v1241, %v1275
  %v1278 = vadd.f32 %v1242, %v1275
  %v1279 = vadd.f32 %v1243, %v1275
  %v1280 = vadd.f32 %v1244, %v1275
  %v1281 = vadd.f32 %v1245, %v1275
  %v1282 = vadd.f32 %v1246, %v1275
  %v1283 = vadd.f32 %v1247, %v1275
  %v1284 = vadd.f32 %v1248, %v1275
  %v1285 = vadd.f32 %v1249, %v1275
  %v1286 = vadd.f32 %v1250, %v1275
  %v1287 = vadd.f32 %v1251, %v1275
  %v1288 = vadd.f32 %v1252, %v1275
  %v1289 = vadd.f32 %v1253, %v1275
  %v1290 = vadd.f32 %v1254, %v1275
  %v1291 = vadd.f32 %v1255, %v1275
  %v1292 = vadd.f32 %v1256, %v1275
  %v1293 = vadd.f32 %v1257, %v1275
  %v1294 = vadd.f32 %v1258, %v1275
  %v1295 = vadd.f32 %v1259, %v1275
  %v1296 = vadd.f32 %v1260, %v1275
  %v1297 = vadd.f32 %v1261, %v1275
  %v1298 = vadd.f32 %v1262, %v1275
  %v1299 = vadd.f32 %v1263, %v1275
  %v1300 = vadd.f32 %v1264, %v1275
  %v1301 = vadd.f32 %v1265, %v1275
  %v1302 = vadd.f32 %v1266, %v1275
  %v1303 = vadd.f32 %v1267, %v1275
  %v1304 = vadd.f32 %v1268, %v1275
  %v1305 = vadd.f32 %v1269, %v1275
  %v1306 = vadd.f32 %v1270, %v1275
  %v1307 = vadd.f32 %v1271, %v1275
  %v1308 = vmax.f32 %v1276, 0.0
  %v1309 = vmax.f32 %v1277, 0.0
  %v1310 = vmax.f32 %v1278, 0.0
  %v1311 = vmax.f32 %v1279, 0.0
  %v1312 = vmax.f32 %v1280, 0.0
  %v1313 = vmax.f32 %v1281, 0.0
  %v1314 = vmax.f32 %v1282, 0.0
  %v1315 = vmax.f32 %v1283, 0.0
  %v1316 = vmax.f32 %v1284, 0.0
  %v1317 = vmax.f32 %v1285, 0.0
  %v1318 = vmax.f32 %v1286, 0.0
  %v1319 = vmax.f32 %v1287, 0.0
  %v1320 = vmax.f32 %v1288, 0.0
  %v1321 = vmax.f32 %v1289, 0.0
  %v1322 = vmax.f32 %v1290, 0.0
  %v1323 = vmax.f32 %v1291, 0.0
  %v1324 = vmax.f32 %v1292, 0.0
  %v1325 = vmax.f32 %v1293, 0.0
  %v1326 = vmax.f32 %v1294, 0.0
  %v1327 = vmax.f32 %v1295, 0.0
  %v1328 = vmax.f32 %v1296, 0.0
  %v1329 = vmax.f32 %v1297, 0.0
  %v1330 = vmax.f32 %v1298, 0.0
  %v1331 = vmax.f32 %v1299, 0.0
  %v1332 = vmax.f32 %v1300, 0.0
  %v1333 = vmax.f32 %v1301, 0.0
  %v1334 = vmax.f32 %v1302, 0.0
  %v1335 = vmax.f32 %v1303, 0.0
  %v1336 = vmax.f32 %v1304, 0.0
  %v1337 = vmax.f32 %v1305, 0.0
  %v1338 = vmax.f32 %v1306, 0.0
  %v1339 = vmax.f32 %v1307, 0.0
  %v1340 = vld [vmem:[%s3] sm:$0xff]
  %v1341 = vld [vmem:[%s3 + $0x8] sm:$0xff]
  %v1342 = vld [vmem:[%s3 + $0x10] sm:$0xff]
  %v1343 = vld [vmem:[%s3 + $0x18] sm:$0xff]
  %v1344 = vld [vmem:[%s3 + $0x20] sm:$0xff]
  %v1345 = vld [vmem:[%s3 + $0x28] sm:$0xff]
  %v1346 = vld [vmem:[%s3 + $0x30] sm:$0xff]
  %v1347 = vld [vmem:[%s3 + $0x38] sm:$0xff]
  %v1348 = vlaneseq
  %v1349 = vshrl.u32 %v1348, 7
  %v1350 = vsub.s32 0, %v1349
  %v1351 = vrot.slane %v26, %v1350
  %v1353 = vsel %vm1028, %v1308, 0
  %v1356 = vsel %vm1028, %v1309, 0
  %v1359 = vsel %vm1028, %v1310, 0
  %v1362 = vsel %vm1028, %v1311, 0
  %v1365 = vsel %vm1028, %v1312, 0
  %v1368 = vsel %vm1028, %v1313, 0
  %v1371 = vsel %vm1028, %v1314, 0
  %v1374 = vsel %vm1028, %v1315, 0
  %v1377 = vsel %vm1028, %v1316, 0
  %v1380 = vsel %vm1028, %v1317, 0
  %v1383 = vsel %vm1028, %v1318, 0
  %v1386 = vsel %vm1028, %v1319, 0
  %v1389 = vsel %vm1028, %v1320, 0
  %v1392 = vsel %vm1028, %v1321, 0
  %v1395 = vsel %vm1028, %v1322, 0
  %v1398 = vsel %vm1028, %v1323, 0
  %v1401 = vsel %vm1028, %v1324, 0
  %v1404 = vsel %vm1028, %v1325, 0
  %v1407 = vsel %vm1028, %v1326, 0
  %v1410 = vsel %vm1028, %v1327, 0
  %v1413 = vsel %vm1028, %v1328, 0
  %v1416 = vsel %vm1028, %v1329, 0
  %v1419 = vsel %vm1028, %v1330, 0
  %v1422 = vsel %vm1028, %v1331, 0
  %v1425 = vsel %vm1028, %v1332, 0
  %v1428 = vsel %vm1028, %v1333, 0
  %v1431 = vsel %vm1028, %v1334, 0
  %v1434 = vsel %vm1028, %v1335, 0
  %v1437 = vsel %vm1028, %v1336, 0
  %v1440 = vsel %vm1028, %v1337, 0
  %v1443 = vsel %vm1028, %v1338, 0
  %v1446 = vsel %vm1028, %v1339, 0
  %1448 = vmatprep.subr.mxu0 0.0
  %1449 = vmatpush1.msra.mxu0 %v1340
  %1450 = vmatprep.subr.mxu0 0.0
  %1451 = vmatpush1.msra.mxu0 %v1341
  %1452 = vmatprep.subr.mxu0 0.0
  %1453 = vmatpush1.msra.mxu0 %v1342
  %1454 = vmatprep.subr.mxu0 0.0
  %1455 = vmatpush1.msra.mxu0 %v1343
  %1456 = vmatprep.subr.mxu0 0.0
  %1457 = vmatpush1.msra.mxu0 %v1344
  %1458 = vmatprep.subr.mxu0 0.0
  %1459 = vmatpush1.msra.mxu0 %v1345
  %1460 = vmatprep.subr.mxu0 0.0
  %1461 = vmatpush1.msra.mxu0 %v1346
  %1462 = vmatprep.subr.mxu0 0.0
  %1463 = vmatpush1.msra.mxu0 %v1347
  %1464 = vmatprep.subr.mxu0 0.0
  %1465 = vmatpush1.msra.mxu0 0.0
  %1466 = vmatprep.subr.mxu0 0.0
  %1467 = vmatpush1.msra.mxu0 0.0
  %1468 = vmatprep.subr.mxu0 0.0
  %1469 = vmatpush1.msra.mxu0 0.0
  %1470 = vmatprep.subr.mxu0 0.0
  %1471 = vmatpush1.msra.mxu0 0.0
  %1472 = vmatprep.subr.mxu0 0.0
  %1473 = vmatpush1.msra.mxu0 0.0
  %1474 = vmatprep.subr.mxu0 0.0
  %1475 = vmatpush1.msra.mxu0 0.0
  %1476 = vmatprep.subr.mxu0 0.0
  %1477 = vmatpush1.msra.mxu0 0.0
  %1478 = vmatprep.subr.mxu0 0.0
  %1479 = vmatpush1.msra.mxu0 0.0
  %1480 = vmatprep.subr.mxu0 0.0
  %1481 = vmatpush1.msra.mxu0 0.0
  %1482 = vmatprep.subr.mxu0 0.0
  %1483 = vmatpush1.msra.mxu0 0.0
  %1484 = vmatprep.subr.mxu0 0.0
  %1485 = vmatpush1.msra.mxu0 0.0
  %1486 = vmatprep.subr.mxu0 0.0
  %1487 = vmatpush1.msra.mxu0 0.0
  %1488 = vmatprep.subr.mxu0 0.0
  %1489 = vmatpush1.msra.mxu0 0.0
  %1490 = vmatprep.subr.mxu0 0.0
  %1491 = vmatpush1.msra.mxu0 0.0
  %1492 = vmatprep.subr.mxu0 0.0
  %1493 = vmatpush1.msra.mxu0 0.0
  %1494 = vmatprep.subr.mxu0 0.0
  %1495 = vmatpush1.msra.mxu0 0.0
  %1496 = vmatprep.subr.mxu0 0.0
  %1497 = vmatpush1.msra.mxu0 0.0
  %1498 = vmatprep.subr.mxu0 0.0
  %1499 = vmatpush1.msra.mxu0 0.0
  %1500 = vmatprep.subr.mxu0 0.0
  %1501 = vmatpush1.msra.mxu0 0.0
  %1502 = vmatprep.subr.mxu0 0.0
  %1503 = vmatpush1.msra.mxu0 0.0
  %1504 = vmatprep.subr.mxu0 0.0
  %1505 = vmatpush1.msra.mxu0 0.0
  %1506 = vmatprep.subr.mxu0 0.0
  %1507 = vmatpush1.msra.mxu0 0.0
  %1508 = vmatprep.subr.mxu0 0.0
  %1509 = vmatpush1.msra.mxu0 0.0
  %1510 = vmatprep.subr.mxu0 0.0
  %1511 = vmatpush1.msra.mxu0 0.0
  %1512 = vmatprep.mubr.f32.mxu0 0.0
  %1513 = vmatmul.mubr.f32.gmra.mrb[0].mxu0 %v1353
  %v1514 = vpop.f32.mrb[0].mxu0
  %v1515 = vadd.f32 %v1351, %v1514
  %v1516 = vpop.f32.mrb[0].mxu0
  %1517 = vmatprep.mubr.f32.mxu0 0.0
  %1518 = vmatmul.mubr.f32.gmra.mrb[0].mxu0 %v1356
  %v1519 = vpop.f32.mrb[0].mxu0
  %v1520 = vadd.f32 %v1351, %v1519
  %v1521 = vpop.f32.mrb[0].mxu0
  %1522 = vmatprep.mubr.f32.mxu0 0.0
  %1523 = vmatmul.mubr.f32.gmra.mrb[0].mxu0 %v1359
  %v1524 = vpop.f32.mrb[0].mxu0
  %v1525 = vadd.f32 %v1351, %v1524
  %v1526 = vpop.f32.mrb[0].mxu0
  %1527 = vmatprep.mubr.f32.mxu0 0.0
  %1528 = vmatmul.mubr.f32.gmra.mrb[0].mxu0 %v1362
  %v1529 = vpop.f32.mrb[0].mxu0
  %v1530 = vadd.f32 %v1351, %v1529
  %v1531 = vpop.f32.mrb[0].mxu0
  %1532 = vmatprep.mubr.f32.mxu0 0.0
  %1533 = vmatmul.mubr.f32.gmra.mrb[0].mxu0 %v1365
  %v1534 = vpop.f32.mrb[0].mxu0
  %v1535 = vadd.f32 %v1351, %v1534
  %v1536 = vpop.f32.mrb[0].mxu0
  %1537 = vmatprep.mubr.f32.mxu0 0.0
  %1538 = vmatmul.mubr.f32.gmra.mrb[0].mxu0 %v1368
  %v1539 = vpop.f32.mrb[0].mxu0
  %v1540 = vadd.f32 %v1351, %v1539
  %v1541 = vpop.f32.mrb[0].mxu0
  %1542 = vmatprep.mubr.f32.mxu0 0.0
  %1543 = vmatmul.mubr.f32.gmra.mrb[0].mxu0 %v1371
  %v1544 = vpop.f32.mrb[0].mxu0
  %v1545 = vadd.f32 %v1351, %v1544
  %v1546 = vpop.f32.mrb[0].mxu0
  %1547 = vmatprep.mubr.f32.mxu0 0.0
  %1548 = vmatmul.mubr.f32.gmra.mrb[0].mxu0 %v1374
  %v1549 = vpop.f32.mrb[0].mxu0
  %v1550 = vadd.f32 %v1351, %v1549
  %v1551 = vpop.f32.mrb[0].mxu0
  %1552 = vmatprep.mubr.f32.mxu0 0.0
  %1553 = vmatmul.mubr.f32.gmra.mrb[0].mxu0 %v1377
  %v1554 = vpop.f32.mrb[0].mxu0
  %v1555 = vadd.f32 %v1351, %v1554
  %v1556 = vpop.f32.mrb[0].mxu0
  %1557 = vmatprep.mubr.f32.mxu0 0.0
  %1558 = vmatmul.mubr.f32.gmra.mrb[0].mxu0 %v1380
  %v1559 = vpop.f32.mrb[0].mxu0
  %v1560 = vadd.f32 %v1351, %v1559
  %v1561 = vpop.f32.mrb[0].mxu0
  %1562 = vmatprep.mubr.f32.mxu0 0.0
  %1563 = vmatmul.mubr.f32.gmra.mrb[0].mxu0 %v1383
  %v1564 = vpop.f32.mrb[0].mxu0
  %v1565 = vadd.f32 %v1351, %v1564
  %v1566 = vpop.f32.mrb[0].mxu0
  %1567 = vmatprep.mubr.f32.mxu0 0.0
  %1568 = vmatmul.mubr.f32.gmra.mrb[0].mxu0 %v1386
  %v1569 = vpop.f32.mrb[0].mxu0
  %v1570 = vadd.f32 %v1351, %v1569
  %v1571 = vpop.f32.mrb[0].mxu0
  %1572 = vmatprep.mubr.f32.mxu0 0.0
  %1573 = vmatmul.mubr.f32.gmra.mrb[0].mxu0 %v1389
  %v1574 = vpop.f32.mrb[0].mxu0
  %v1575 = vadd.f32 %v1351, %v1574
  %v1576 = vpop.f32.mrb[0].mxu0
  %1577 = vmatprep.mubr.f32.mxu0 0.0
  %1578 = vmatmul.mubr.f32.gmra.mrb[0].mxu0 %v1392
  %v1579 = vpop.f32.mrb[0].mxu0
  %v1580 = vadd.f32 %v1351, %v1579
  %v1581 = vpop.f32.mrb[0].mxu0
  %1582 = vmatprep.mubr.f32.mxu0 0.0
  %1583 = vmatmul.mubr.f32.gmra.mrb[0].mxu0 %v1395
  %v1584 = vpop.f32.mrb[0].mxu0
  %v1585 = vadd.f32 %v1351, %v1584
  %v1586 = vpop.f32.mrb[0].mxu0
  %1587 = vmatprep.mubr.f32.mxu0 0.0
  %1588 = vmatmul.mubr.f32.gmra.mrb[0].mxu0 %v1398
  %v1589 = vpop.f32.mrb[0].mxu0
  %v1590 = vadd.f32 %v1351, %v1589
  %v1591 = vpop.f32.mrb[0].mxu0
  %1592 = vmatprep.mubr.f32.mxu0 0.0
  %1593 = vmatmul.mubr.f32.gmra.mrb[0].mxu0 %v1401
  %v1594 = vpop.f32.mrb[0].mxu0
  %v1595 = vadd.f32 %v1351, %v1594
  %v1596 = vpop.f32.mrb[0].mxu0
  %1597 = vmatprep.mubr.f32.mxu0 0.0
  %1598 = vmatmul.mubr.f32.gmra.mrb[0].mxu0 %v1404
  %v1599 = vpop.f32.mrb[0].mxu0
  %v1600 = vadd.f32 %v1351, %v1599
  %v1601 = vpop.f32.mrb[0].mxu0
  %1602 = vmatprep.mubr.f32.mxu0 0.0
  %1603 = vmatmul.mubr.f32.gmra.mrb[0].mxu0 %v1407
  %v1604 = vpop.f32.mrb[0].mxu0
  %v1605 = vadd.f32 %v1351, %v1604
  %v1606 = vpop.f32.mrb[0].mxu0
  %1607 = vmatprep.mubr.f32.mxu0 0.0
  %1608 = vmatmul.mubr.f32.gmra.mrb[0].mxu0 %v1410
  %v1609 = vpop.f32.mrb[0].mxu0
  %v1610 = vadd.f32 %v1351, %v1609
  %v1611 = vpop.f32.mrb[0].mxu0
  %1612 = vmatprep.mubr.f32.mxu0 0.0
  %1613 = vmatmul.mubr.f32.gmra.mrb[0].mxu0 %v1413
  %v1614 = vpop.f32.mrb[0].mxu0
  %v1615 = vadd.f32 %v1351, %v1614
  %v1616 = vpop.f32.mrb[0].mxu0
  %1617 = vmatprep.mubr.f32.mxu0 0.0
  %1618 = vmatmul.mubr.f32.gmra.mrb[0].mxu0 %v1416
  %v1619 = vpop.f32.mrb[0].mxu0
  %v1620 = vadd.f32 %v1351, %v1619
  %v1621 = vpop.f32.mrb[0].mxu0
  %1622 = vmatprep.mubr.f32.mxu0 0.0
  %1623 = vmatmul.mubr.f32.gmra.mrb[0].mxu0 %v1419
  %v1624 = vpop.f32.mrb[0].mxu0
  %v1625 = vadd.f32 %v1351, %v1624
  %v1626 = vpop.f32.mrb[0].mxu0
  %1627 = vmatprep.mubr.f32.mxu0 0.0
  %1628 = vmatmul.mubr.f32.gmra.mrb[0].mxu0 %v1422
  %v1629 = vpop.f32.mrb[0].mxu0
  %v1630 = vadd.f32 %v1351, %v1629
  %v1631 = vpop.f32.mrb[0].mxu0
  %1632 = vmatprep.mubr.f32.mxu0 0.0
  %1633 = vmatmul.mubr.f32.gmra.mrb[0].mxu0 %v1425
  %v1634 = vpop.f32.mrb[0].mxu0
  %v1635 = vadd.f32 %v1351, %v1634
  %v1636 = vpop.f32.mrb[0].mxu0
  %1637 = vmatprep.mubr.f32.mxu0 0.0
  %1638 = vmatmul.mubr.f32.gmra.mrb[0].mxu0 %v1428
  %v1639 = vpop.f32.mrb[0].mxu0
  %v1640 = vadd.f32 %v1351, %v1639
  %v1641 = vpop.f32.mrb[0].mxu0
  %1642 = vmatprep.mubr.f32.mxu0 0.0
  %1643 = vmatmul.mubr.f32.gmra.mrb[0].mxu0 %v1431
  %v1644 = vpop.f32.mrb[0].mxu0
  %v1645 = vadd.f32 %v1351, %v1644
  %v1646 = vpop.f32.mrb[0].mxu0
  %1647 = vmatprep.mubr.f32.mxu0 0.0
  %1648 = vmatmul.mubr.f32.gmra.mrb[0].mxu0 %v1434
  %v1649 = vpop.f32.mrb[0].mxu0
  %v1650 = vadd.f32 %v1351, %v1649
  %v1651 = vpop.f32.mrb[0].mxu0
  %1652 = vmatprep.mubr.f32.mxu0 0.0
  %1653 = vmatmul.mubr.f32.gmra.mrb[0].mxu0 %v1437
  %v1654 = vpop.f32.mrb[0].mxu0
  %v1655 = vadd.f32 %v1351, %v1654
  %v1656 = vpop.f32.mrb[0].mxu0
  %1657 = vmatprep.mubr.f32.mxu0 0.0
  %1658 = vmatmul.mubr.f32.gmra.mrb[0].mxu0 %v1440
  %v1659 = vpop.f32.mrb[0].mxu0
  %v1660 = vadd.f32 %v1351, %v1659
  %v1661 = vpop.f32.mrb[0].mxu0
  %1662 = vmatprep.mubr.f32.mxu0 0.0
  %1663 = vmatmul.mubr.f32.gmra.mrb[0].mxu0 %v1443
  %v1664 = vpop.f32.mrb[0].mxu0
  %v1665 = vadd.f32 %v1351, %v1664
  %v1666 = vpop.f32.mrb[0].mxu0
  %1667 = vmatprep.mubr.f32.mxu0 0.0
  %1668 = vmatmul.mubr.f32.gmra.mrb[0].mxu0 %v1446
  %v1669 = vpop.f32.mrb[0].mxu0
  %v1670 = vadd.f32 %v1351, %v1669
  %v1671 = vpop.f32.mrb[0].mxu0
  %1672 = vdwg.mxu0
  %v1673 = vxor.u32 %v1515, 2147483648
  %v1674 = vxor.u32 %v1520, 2147483648
  %v1675 = vxor.u32 %v1525, 2147483648
  %v1676 = vxor.u32 %v1530, 2147483648
  %v1677 = vxor.u32 %v1535, 2147483648
  %v1678 = vxor.u32 %v1540, 2147483648
  %v1679 = vxor.u32 %v1545, 2147483648
  %v1680 = vxor.u32 %v1550, 2147483648
  %v1681 = vxor.u32 %v1555, 2147483648
  %v1682 = vxor.u32 %v1560, 2147483648
  %v1683 = vxor.u32 %v1565, 2147483648
  %v1684 = vxor.u32 %v1570, 2147483648
  %v1685 = vxor.u32 %v1575, 2147483648
  %v1686 = vxor.u32 %v1580, 2147483648
  %v1687 = vxor.u32 %v1585, 2147483648
  %v1688 = vxor.u32 %v1590, 2147483648
  %v1689 = vxor.u32 %v1595, 2147483648
  %v1690 = vxor.u32 %v1600, 2147483648
  %v1691 = vxor.u32 %v1605, 2147483648
  %v1692 = vxor.u32 %v1610, 2147483648
  %v1693 = vxor.u32 %v1615, 2147483648
  %v1694 = vxor.u32 %v1620, 2147483648
  %v1695 = vxor.u32 %v1625, 2147483648
  %v1696 = vxor.u32 %v1630, 2147483648
  %v1697 = vxor.u32 %v1635, 2147483648
  %v1698 = vxor.u32 %v1640, 2147483648
  %v1699 = vxor.u32 %v1645, 2147483648
  %v1700 = vxor.u32 %v1650, 2147483648
  %v1701 = vxor.u32 %v1655, 2147483648
  %v1702 = vxor.u32 %v1660, 2147483648
  %v1703 = vxor.u32 %v1665, 2147483648
  %v1704 = vxor.u32 %v1670, 2147483648
  %v1705 = vmul.f32 %v1673, 1.442695
  %v1706 = vpow.pop %v1705
  %v1707 = vmul.f32 %v1674, 1.442695
  %v1708 = vpow.pop %v1707
  %v1709 = vmul.f32 %v1675, 1.442695
  %v1710 = vpow.pop %v1709
  %v1711 = vmul.f32 %v1676, 1.442695
  %v1712 = vpow.pop %v1711
  %v1713 = vmul.f32 %v1677, 1.442695
  %v1714 = vpow.pop %v1713
  %v1715 = vmul.f32 %v1678, 1.442695
  %v1716 = vpow.pop %v1715
  %v1717 = vmul.f32 %v1679, 1.442695
  %v1718 = vpow.pop %v1717
  %v1719 = vmul.f32 %v1680, 1.442695
  %v1720 = vpow.pop %v1719
  %v1721 = vmul.f32 %v1681, 1.442695
  %v1722 = vpow.pop %v1721
  %v1723 = vmul.f32 %v1682, 1.442695
  %v1724 = vpow.pop %v1723
  %v1725 = vmul.f32 %v1683, 1.442695
  %v1726 = vpow.pop %v1725
  %v1727 = vmul.f32 %v1684, 1.442695
  %v1728 = vpow.pop %v1727
  %v1729 = vmul.f32 %v1685, 1.442695
  %v1730 = vpow.pop %v1729
  %v1731 = vmul.f32 %v1686, 1.442695
  %v1732 = vpow.pop %v1731
  %v1733 = vmul.f32 %v1687, 1.442695
  %v1734 = vpow.pop %v1733
  %v1735 = vmul.f32 %v1688, 1.442695
  %v1736 = vpow.pop %v1735
  %v1737 = vmul.f32 %v1689, 1.442695
  %v1738 = vpow.pop %v1737
  %v1739 = vmul.f32 %v1690, 1.442695
  %v1740 = vpow.pop %v1739
  %v1741 = vmul.f32 %v1691, 1.442695
  %v1742 = vpow.pop %v1741
  %v1743 = vmul.f32 %v1692, 1.442695
  %v1744 = vpow.pop %v1743
  %v1745 = vmul.f32 %v1693, 1.442695
  %v1746 = vpow.pop %v1745
  %v1747 = vmul.f32 %v1694, 1.442695
  %v1748 = vpow.pop %v1747
  %v1749 = vmul.f32 %v1695, 1.442695
  %v1750 = vpow.pop %v1749
  %v1751 = vmul.f32 %v1696, 1.442695
  %v1752 = vpow.pop %v1751
  %v1753 = vmul.f32 %v1697, 1.442695
  %v1754 = vpow.pop %v1753
  %v1755 = vmul.f32 %v1698, 1.442695
  %v1756 = vpow.pop %v1755
  %v1757 = vmul.f32 %v1699, 1.442695
  %v1758 = vpow.pop %v1757
  %v1759 = vmul.f32 %v1700, 1.442695
  %v1760 = vpow.pop %v1759
  %v1761 = vmul.f32 %v1701, 1.442695
  %v1762 = vpow.pop %v1761
  %v1763 = vmul.f32 %v1702, 1.442695
  %v1764 = vpow.pop %v1763
  %v1765 = vmul.f32 %v1703, 1.442695
  %v1766 = vpow.pop %v1765
  %v1767 = vmul.f32 %v1704, 1.442695
  %v1768 = vpow.pop %v1767
  %v1769 = vadd.f32 %v1706, 1.0
  %v1770 = vadd.f32 %v1708, 1.0
  %v1771 = vadd.f32 %v1710, 1.0
  %v1772 = vadd.f32 %v1712, 1.0
  %v1773 = vadd.f32 %v1714, 1.0
  %v1774 = vadd.f32 %v1716, 1.0
  %v1775 = vadd.f32 %v1718, 1.0
  %v1776 = vadd.f32 %v1720, 1.0
  %v1777 = vadd.f32 %v1722, 1.0
  %v1778 = vadd.f32 %v1724, 1.0
  %v1779 = vadd.f32 %v1726, 1.0
  %v1780 = vadd.f32 %v1728, 1.0
  %v1781 = vadd.f32 %v1730, 1.0
  %v1782 = vadd.f32 %v1732, 1.0
  %v1783 = vadd.f32 %v1734, 1.0
  %v1784 = vadd.f32 %v1736, 1.0
  %v1785 = vadd.f32 %v1738, 1.0
  %v1786 = vadd.f32 %v1740, 1.0
  %v1787 = vadd.f32 %v1742, 1.0
  %v1788 = vadd.f32 %v1744, 1.0
  %v1789 = vadd.f32 %v1746, 1.0
  %v1790 = vadd.f32 %v1748, 1.0
  %v1791 = vadd.f32 %v1750, 1.0
  %v1792 = vadd.f32 %v1752, 1.0
  %v1793 = vadd.f32 %v1754, 1.0
  %v1794 = vadd.f32 %v1756, 1.0
  %v1795 = vadd.f32 %v1758, 1.0
  %v1796 = vadd.f32 %v1760, 1.0
  %v1797 = vadd.f32 %v1762, 1.0
  %v1798 = vadd.f32 %v1764, 1.0
  %v1799 = vadd.f32 %v1766, 1.0
  %v1800 = vadd.f32 %v1768, 1.0
  %v1801 = vrcp.pop %v1769
  %v1802 = vmul.f32 1.0, %v1801
  %v1803 = vrcp.pop %v1770
  %v1804 = vmul.f32 1.0, %v1803
  %v1805 = vrcp.pop %v1771
  %v1806 = vmul.f32 1.0, %v1805
  %v1807 = vrcp.pop %v1772
  %v1808 = vmul.f32 1.0, %v1807
  %v1809 = vrcp.pop %v1773
  %v1810 = vmul.f32 1.0, %v1809
  %v1811 = vrcp.pop %v1774
  %v1812 = vmul.f32 1.0, %v1811
  %v1813 = vrcp.pop %v1775
  %v1814 = vmul.f32 1.0, %v1813
  %v1815 = vrcp.pop %v1776
  %v1816 = vmul.f32 1.0, %v1815
  %v1817 = vrcp.pop %v1777
  %v1818 = vmul.f32 1.0, %v1817
  %v1819 = vrcp.pop %v1778
  %v1820 = vmul.f32 1.0, %v1819
  %v1821 = vrcp.pop %v1779
  %v1822 = vmul.f32 1.0, %v1821
  %v1823 = vrcp.pop %v1780
  %v1824 = vmul.f32 1.0, %v1823
  %v1825 = vrcp.pop %v1781
  %v1826 = vmul.f32 1.0, %v1825
  %v1827 = vrcp.pop %v1782
  %v1828 = vmul.f32 1.0, %v1827
  %v1829 = vrcp.pop %v1783
  %v1830 = vmul.f32 1.0, %v1829
  %v1831 = vrcp.pop %v1784
  %v1832 = vmul.f32 1.0, %v1831
  %v1833 = vrcp.pop %v1785
  %v1834 = vmul.f32 1.0, %v1833
  %v1835 = vrcp.pop %v1786
  %v1836 = vmul.f32 1.0, %v1835
  %v1837 = vrcp.pop %v1787
  %v1838 = vmul.f32 1.0, %v1837
  %v1839 = vrcp.pop %v1788
  %v1840 = vmul.f32 1.0, %v1839
  %v1841 = vrcp.pop %v1789
  %v1842 = vmul.f32 1.0, %v1841
  %v1843 = vrcp.pop %v1790
  %v1844 = vmul.f32 1.0, %v1843
  %v1845 = vrcp.pop %v1791
  %v1846 = vmul.f32 1.0, %v1845
  %v1847 = vrcp.pop %v1792
  %v1848 = vmul.f32 1.0, %v1847
  %v1849 = vrcp.pop %v1793
  %v1850 = vmul.f32 1.0, %v1849
  %v1851 = vrcp.pop %v1794
  %v1852 = vmul.f32 1.0, %v1851
  %v1853 = vrcp.pop %v1795
  %v1854 = vmul.f32 1.0, %v1853
  %v1855 = vrcp.pop %v1796
  %v1856 = vmul.f32 1.0, %v1855
  %v1857 = vrcp.pop %v1797
  %v1858 = vmul.f32 1.0, %v1857
  %v1859 = vrcp.pop %v1798
  %v1860 = vmul.f32 1.0, %v1859
  %v1861 = vrcp.pop %v1799
  %v1862 = vmul.f32 1.0, %v1861
  %v1863 = vrcp.pop %v1800
  %v1864 = vmul.f32 1.0, %v1863
  %1865 = vst.msk [vmem:[%s5] sm:$0xff] %vm65, %v1802
  %1866 = vst.msk [vmem:[%s5 + $0x8] sm:$0xff] %vm65, %v1804
  %1867 = vst.msk [vmem:[%s5 + $0x10] sm:$0xff] %vm65, %v1806
  %1868 = vst.msk [vmem:[%s5 + $0x18] sm:$0xff] %vm65, %v1808
  %1869 = vst.msk [vmem:[%s5 + $0x20] sm:$0xff] %vm65, %v1810
  %1870 = vst.msk [vmem:[%s5 + $0x28] sm:$0xff] %vm65, %v1812
  %1871 = vst.msk [vmem:[%s5 + $0x30] sm:$0xff] %vm65, %v1814
  %1872 = vst.msk [vmem:[%s5 + $0x38] sm:$0xff] %vm65, %v1816
  %1873 = vst.msk [vmem:[%s5 + $0x40] sm:$0xff] %vm65, %v1818
  %1874 = vst.msk [vmem:[%s5 + $0x48] sm:$0xff] %vm65, %v1820
  %1875 = vst.msk [vmem:[%s5 + $0x50] sm:$0xff] %vm65, %v1822
  %1876 = vst.msk [vmem:[%s5 + $0x58] sm:$0xff] %vm65, %v1824
  %1877 = vst.msk [vmem:[%s5 + $0x60] sm:$0xff] %vm65, %v1826
  %1878 = vst.msk [vmem:[%s5 + $0x68] sm:$0xff] %vm65, %v1828
  %1879 = vst.msk [vmem:[%s5 + $0x70] sm:$0xff] %vm65, %v1830
  %1880 = vst.msk [vmem:[%s5 + $0x78] sm:$0xff] %vm65, %v1832
  %1881 = vst.msk [vmem:[%s5 + $0x80] sm:$0xff] %vm65, %v1834
  %1882 = vst.msk [vmem:[%s5 + $0x88] sm:$0xff] %vm65, %v1836
  %1883 = vst.msk [vmem:[%s5 + $0x90] sm:$0xff] %vm65, %v1838
  %1884 = vst.msk [vmem:[%s5 + $0x98] sm:$0xff] %vm65, %v1840
  %1885 = vst.msk [vmem:[%s5 + $0xa0] sm:$0xff] %vm65, %v1842
  %1886 = vst.msk [vmem:[%s5 + $0xa8] sm:$0xff] %vm65, %v1844
  %1887 = vst.msk [vmem:[%s5 + $0xb0] sm:$0xff] %vm65, %v1846
  %1888 = vst.msk [vmem:[%s5 + $0xb8] sm:$0xff] %vm65, %v1848
  %1889 = vst.msk [vmem:[%s5 + $0xc0] sm:$0xff] %vm65, %v1850
  %1890 = vst.msk [vmem:[%s5 + $0xc8] sm:$0xff] %vm65, %v1852
  %1891 = vst.msk [vmem:[%s5 + $0xd0] sm:$0xff] %vm65, %v1854
  %1892 = vst.msk [vmem:[%s5 + $0xd8] sm:$0xff] %vm65, %v1856
  %1893 = vst.msk [vmem:[%s5 + $0xe0] sm:$0xff] %vm65, %v1858
  %1894 = vst.msk [vmem:[%s5 + $0xe8] sm:$0xff] %vm65, %v1860
  %1895 = vst.msk [vmem:[%s5 + $0xf0] sm:$0xff] %vm65, %v1862
  %1896 = vst.msk [vmem:[%s5 + $0xf8] sm:$0xff] %vm65, %v1864
  // Predicated region
  $region22: #{tpu_custom_call.1} parent=0 // pred_check
    _
  $region23: #{tpu_custom_call.1} parent=0 // pred_check_branch
    %1898 = sbr.rel (0) target = $region25
  $region24: #{tpu_custom_call.1} parent=0 // pred_region
    _
  $region25: #{tpu_custom_call.1} parent=0 // pred_fallthru
    _
  // Predicated region
  $region26: #{tpu_custom_call.1} parent=0 // pred_check
    _
  $region27: #{tpu_custom_call.1} parent=0 // pred_check_branch
    %1900 = sbr.rel (0) target = $region29
  $region28: #{tpu_custom_call.1} parent=0 // pred_region
    _
  $region29: #{tpu_custom_call.1} parent=0 // pred_fallthru
    _

</llo_original>
